<compile_context>
chip_gen: v7x
topology: tpu7x:2x2x1
jax: 0.10.0
libtpu: 0.0.40
codegen_flags: <defaults>
</compile_context>

<pallas_src>
import functools

import jax
import jax.numpy as jnp
import numpy as np
from jax.experimental import pallas as pl
from jax.experimental.pallas import tpu as pltpu


def net3_kernel(xT_ref, p_ref, oT_ref, *, x_dim, h_dim, n_layers, col_offs):
    """xT_ref: (x_dim, Bt); p_ref: packed params (h_dim, cols); oT_ref: (h_dim, Bt).

    Batch-in-lanes: activations are (feature, batch) so the batch dimension is
    lane-dense.  All weight segments in p_ref are stored transposed (out, in)
    with scale factors already folded in, each starting on a 128-lane boundary.
    """
    hT = xT_ref[...]                                         # (x_dim, Bt)

    # ---- layer0: sin(W0^T @ (x_scale * x)^T + b0^T); x_scale folded into W0^T ----
    c0 = col_offs["w0"]
    w0T = p_ref[:, c0:c0 + x_dim]                            # (h_dim, x_dim)
    b0 = p_ref[:, col_offs["b0"]:col_offs["b0"] + 1]         # (h_dim, 1)
    hT = jnp.sin(jnp.dot(w0T, hT, preferred_element_type=jnp.float32) + b0)

    # ---- layer1: n_layers x sin(W1_n^T @ (alpha * h)^T + b1_n^T); alpha folded ----
    for n in range(n_layers):
        cw = col_offs["w1"][n]
        cb = col_offs["b1"][n]
        wT = p_ref[:, cw:cw + h_dim]                         # (h_dim, h_dim)
        b = p_ref[:, cb:cb + 1]                              # (h_dim, 1)
        hT = jnp.sin(jnp.dot(wT, hT, preferred_element_type=jnp.float32) + b)

    # ---- layer2: W2^T @ h^T; W2 already gamma-scaled, bias identically zero.
    # W2^T is zero-padded to h_dim rows -> write the full lane-dense result;
    # the [:y_dim] slice happens in the wrapper.
    c2 = col_offs["w2"]
    w2T = p_ref[:, c2:c2 + h_dim]                            # (h_dim, h_dim)
    oT_ref[...] = jnp.dot(w2T, hT,
                          preferred_element_type=jnp.float32).astype(oT_ref.dtype)


def net3_forward(x, packed, col_offs, *, x_dim, h_dim, n_layers, y_dim,
                 block_b=8192):
    """x: (B, x_dim) -> (B, y_dim). Transposes to batch-in-lanes around the kernel."""
    B = x.shape[0]
    xT = x.T                                                  # (x_dim, B), batch in lanes
    kernel = functools.partial(net3_kernel, x_dim=x_dim, h_dim=h_dim,
                               n_layers=n_layers, col_offs=col_offs)
    out_shape = jax.ShapeDtypeStruct((h_dim, B), jnp.float32)

    if B <= block_b:
        # Whole problem resident in VMEM: single gridless invocation, 2 input
        # DMAs, lane-dense stores, no per-grid-step overhead.
        yT = pl.pallas_call(
            kernel,
            out_shape=out_shape,
            in_specs=[
                pl.BlockSpec(memory_space=pltpu.MemorySpace.VMEM),
                pl.BlockSpec(memory_space=pltpu.MemorySpace.VMEM),
            ],
            out_specs=pl.BlockSpec(memory_space=pltpu.MemorySpace.VMEM),
        )(xT, packed)
    else:
        # Fallback for very large batches: tile the lane (batch) dimension;
        # packed weights stay resident across the grid (constant index_map).
        rows, cols = packed.shape
        grid = (pl.cdiv(B, block_b),)
        yT = pl.pallas_call(
            kernel,
            out_shape=out_shape,
            grid=grid,
            in_specs=[
                pl.BlockSpec((x_dim, block_b), lambda i: (0, i)),
                pl.BlockSpec((rows, cols), lambda i: (0, 0)),
            ],
            out_specs=pl.BlockSpec((h_dim, block_b), lambda i: (0, i)),
            compiler_params=pltpu.CompilerParams(
                dimension_semantics=("arbitrary",)),
        )(xT, packed)

    # Rows >= y_dim of yT are exactly zero (zero-padded W2^T rows): slice and
    # un-transpose in the wrapper (trivial XLA ops) rather than in the kernel.
    return yT[:y_dim, :].T


def init_params(key, x_dim, h_dim, n_layers, y_dim, alpha, gamma):
    """Deterministic init mimicking Net3.__init__ (weights stored as (in, out))."""
    ks = jax.random.split(key, 3 + 2 * n_layers)
    ki = iter(ks)

    def unif(k, shape, bound):
        return jax.random.uniform(k, shape, jnp.float32, -bound, bound)

    # layer0: Sin(x_dim, h_dim, x_scale, is_first=True)
    w0 = unif(next(ki), (x_dim, h_dim), 1.0 / x_dim)
    b0 = unif(next(ki), (1, h_dim), 1.0 / np.sqrt(x_dim))

    # layer1: n_layers x Sin(h_dim, h_dim, alpha, is_first=False)
    w_bound = np.sqrt(6.0 / h_dim) / alpha
    b_bound = 1.0 / np.sqrt(h_dim)
    w1s, b1s = [], []
    for _ in range(n_layers):
        w1s.append(unif(next(ki), (h_dim, h_dim), w_bound))
        b1s.append(unif(next(ki), (1, h_dim), b_bound))

    # layer2: Linear(h_dim, y_dim); weight *= gamma, bias *= 0
    w2 = unif(next(ki), (h_dim, y_dim), 1.0 / np.sqrt(h_dim)) * gamma
    b2 = jnp.zeros((1, y_dim), jnp.float32)
    return (w0, b0, w1s, b1s, w2, b2)


def pack_params(raw, x_scale, alpha, x_dim, h_dim, n_layers, y_dim,
                lane_align=128):
    """Fold scales, transpose weights to (out, in), 128-lane-align each segment,
    and stack everything into one (h_dim, cols) buffer for the batch-in-lanes
    kernel.  Returns (packed, col_offs)."""
    w0, b0, w1s, b1s, w2, _b2 = raw
    assert y_dim <= h_dim
    segs = []
    off = 0

    def add(arr):
        nonlocal off
        arr = jnp.asarray(arr, jnp.float32)
        r, c = arr.shape
        padded_c = ((c + lane_align - 1) // lane_align) * lane_align
        seg = jnp.zeros((h_dim, padded_c), jnp.float32).at[:r, :c].set(arr)
        segs.append(seg)
        start = off
        off += padded_c
        return start

    col_offs = {}
    # layer0: x_scale folded into W0; stored transposed (h_dim, x_dim)
    col_offs["w0"] = add((x_scale * w0).T)
    col_offs["b0"] = add(b0.reshape(1, h_dim).T)               # (h_dim, 1)
    # layer1: alpha folded into each W1_n; stored transposed (h_dim, h_dim)
    col_offs["w1"], col_offs["b1"] = [], []
    for n in range(n_layers):
        col_offs["w1"].append(add((alpha * w1s[n]).T))
        col_offs["b1"].append(add(b1s[n].reshape(1, h_dim).T))
    # layer2: gamma already folded at init; bias identically zero -> dropped.
    # Stored transposed (y_dim, h_dim) and zero-padded to h_dim rows.
    col_offs["w2"] = add(w2.T)

    packed = jnp.concatenate(segs, axis=1)                     # (h_dim, off)
    return packed, col_offs


def net3_reference(x, raw, x_scale, alpha):
    """Pure-JAX reference (un-folded params, explicit scaling, original layout)."""
    w0, b0, w1s, b1s, w2, b2 = raw
    h = jnp.sin((x_scale * x) @ w0 + b0)
    for w, b in zip(w1s, b1s):
        h = jnp.sin((alpha * h) @ w + b)
    return h @ w2 + b2


if __name__ == "__main__":
    # SMALL config consistent with the module.
    x_dim, h_dim, n_layers, y_dim = 4, 32, 2, 4
    x_scale, alpha, gamma = 1.5, 2.0, 0.5
    B_small, B_large = 8, 1024

    key = jax.random.PRNGKey(0)
    kx, kx2, kp = jax.random.split(key, 3)

    raw = init_params(kp, x_dim, h_dim, n_layers, y_dim, alpha, gamma)
    packed, col_offs = pack_params(raw, x_scale, alpha, x_dim, h_dim,
                                   n_layers, y_dim)

    fwd = functools.partial(net3_forward, x_dim=x_dim, h_dim=h_dim,
                            n_layers=n_layers, y_dim=y_dim)

    # Small batch: gridless single-shot kernel (batch in lanes).
    x = jax.random.normal(kx, (B_small, x_dim), jnp.float32)
    y = jax.block_until_ready(fwd(x, packed, col_offs))
    y_ref = net3_reference(x, raw, x_scale, alpha)
    assert y.shape == (B_small, y_dim)
    assert jnp.allclose(y, y_ref, atol=1e-5, rtol=1e-5), "small-batch mismatch"

    # Larger batch: still a single gridless invocation (working set << VMEM),
    # lane-dense activations/stores with batch = 1024 lanes.
    xl = jax.random.normal(kx2, (B_large, x_dim), jnp.float32)
    yl = jax.block_until_ready(fwd(xl, packed, col_offs))
    yl_ref = net3_reference(xl, raw, x_scale, alpha)
    assert yl.shape == (B_large, y_dim)
    assert jnp.allclose(yl, yl_ref, atol=1e-5, rtol=1e-5), "large-batch mismatch"

    print("KERNEL_OK")
</pallas_src>

<mosaic_0001>
module attributes {stable_mosaic.version = 11 : i64} {
  func.func @net3_kernel(%arg0: memref<4x8xf32, #tpu.memory_space<vmem>>, %arg1: memref<32x896xf32, #tpu.memory_space<vmem>>, %arg2: memref<32x8xf32, #tpu.memory_space<vmem>>) attributes {dimension_semantics = [], scalar_prefetch = 0 : i64, scratch_operands = 0 : i64, tpu.core_type = #tpu.core_type<tc>} {
    %c0 = arith.constant 0 : index
    %c0_0 = arith.constant 0 : index
    %0 = vector.load %arg0[%c0, %c0_0] : memref<4x8xf32, #tpu.memory_space<vmem>>, vector<4x8xf32>
    %c0_1 = arith.constant 0 : index
    %c0_2 = arith.constant 0 : index
    %1 = vector.load %arg1[%c0_1, %c0_2] : memref<32x896xf32, #tpu.memory_space<vmem>>, vector<32x4xf32>
    %c0_3 = arith.constant 0 : index
    %c128 = arith.constant 128 : index
    %2 = vector.load %arg1[%c0_3, %c128] : memref<32x896xf32, #tpu.memory_space<vmem>>, vector<32x1xf32>
    %cst = arith.constant dense<0.000000e+00> : vector<32x8xf32>
    %3 = tpu.matmul %1, %0, %cst {dimension_numbers = #tpu.dot_dimension_numbers<[1], [0], [0], [1], [0, 0, 1, 1], [], []>} : vector<32x4xf32>, vector<4x8xf32>, vector<32x8xf32> -> vector<32x8xf32>
    %4 = vector.broadcast %2 : vector<32x1xf32> to vector<32x8xf32>
    %5 = arith.addf %3, %4 : vector<32x8xf32>
    %6 = math.sin %5 : vector<32x8xf32>
    %c0_4 = arith.constant 0 : index
    %c256 = arith.constant 256 : index
    %7 = vector.load %arg1[%c0_4, %c256] : memref<32x896xf32, #tpu.memory_space<vmem>>, vector<32x32xf32>
    %c0_5 = arith.constant 0 : index
    %c384 = arith.constant 384 : index
    %8 = vector.load %arg1[%c0_5, %c384] : memref<32x896xf32, #tpu.memory_space<vmem>>, vector<32x1xf32>
    %cst_6 = arith.constant dense<0.000000e+00> : vector<32x8xf32>
    %9 = tpu.matmul %7, %6, %cst_6 {dimension_numbers = #tpu.dot_dimension_numbers<[1], [0], [0], [1], [0, 0, 1, 1], [], []>} : vector<32x32xf32>, vector<32x8xf32>, vector<32x8xf32> -> vector<32x8xf32>
    %10 = vector.broadcast %8 : vector<32x1xf32> to vector<32x8xf32>
    %11 = arith.addf %9, %10 : vector<32x8xf32>
    %12 = math.sin %11 : vector<32x8xf32>
    %c0_7 = arith.constant 0 : index
    %c512 = arith.constant 512 : index
    %13 = vector.load %arg1[%c0_7, %c512] : memref<32x896xf32, #tpu.memory_space<vmem>>, vector<32x32xf32>
    %c0_8 = arith.constant 0 : index
    %c640 = arith.constant 640 : index
    %14 = vector.load %arg1[%c0_8, %c640] : memref<32x896xf32, #tpu.memory_space<vmem>>, vector<32x1xf32>
    %cst_9 = arith.constant dense<0.000000e+00> : vector<32x8xf32>
    %15 = tpu.matmul %13, %12, %cst_9 {dimension_numbers = #tpu.dot_dimension_numbers<[1], [0], [0], [1], [0, 0, 1, 1], [], []>} : vector<32x32xf32>, vector<32x8xf32>, vector<32x8xf32> -> vector<32x8xf32>
    %16 = vector.broadcast %14 : vector<32x1xf32> to vector<32x8xf32>
    %17 = arith.addf %15, %16 : vector<32x8xf32>
    %18 = math.sin %17 : vector<32x8xf32>
    %c0_10 = arith.constant 0 : index
    %c768 = arith.constant 768 : index
    %19 = vector.load %arg1[%c0_10, %c768] : memref<32x896xf32, #tpu.memory_space<vmem>>, vector<32x32xf32>
    %cst_11 = arith.constant dense<0.000000e+00> : vector<32x8xf32>
    %20 = tpu.matmul %19, %18, %cst_11 {dimension_numbers = #tpu.dot_dimension_numbers<[1], [0], [0], [1], [0, 0, 1, 1], [], []>} : vector<32x32xf32>, vector<32x8xf32>, vector<32x8xf32> -> vector<32x8xf32>
    %c0_12 = arith.constant 0 : index
    %c0_13 = arith.constant 0 : index
    %21 = vector.load %arg2[%c0_12, %c0_13] : memref<32x8xf32, #tpu.memory_space<vmem>>, vector<32x8xf32>
    tpu.vector_store %arg2[%c0_12, %c0_13], %20 {strides = array<i32>} : memref<32x8xf32, #tpu.memory_space<vmem>>, vector<32x8xf32>,
    return
  }
}

</mosaic_0001>

<llo_original>
// kernel: tpu_custom_call.1
$region0: #{tpu_custom_call.1}
  #allocation0 [shape = 'u32[]', space=smem, size = 0x4, offset = 0x4, fixed_abs, tag = 'smem constant byte address 0x4 - core index']
  #allocation1 [shape = 'u32[144,128]{1,0:T(1,128)}', space=vmem, size = 0x12000, scoped, tag = 'internal scratch']
  %s0 = inlined_call_operand.hbm [shape: f32[4,8], index: 0, kind: input, shape index: {}]
  %s1 = inlined_call_operand.hbm [shape: f32[32,896], index: 1, kind: input, shape index: {}]
  %s2 = inlined_call_operand.vmem [shape: f32[32,8], index: 2, kind: output, shape index: {}]
  %s3 = sld [smem:[#allocation0]]
  $region26: #{tpu_custom_call.1} parent=0
    _
  %s5 = ssub.s32 1, %s3
  %s6 = scalar_select 0, %s5, %s3
  $region1: #{tpu_custom_call.1} parent=0
    #allocation2 [shape = 'u8[2048]{0}', space=vmem, size = 0x800, scoped, tag = 'input window, operand 0, single buffered']
    #allocation3 [shape = 's32[1]{0}', space=sflag, size = 0x4, scoped, tag = 'scoped memory for tpu_custom_call.1']
    #allocation4 [shape = 'u8[114688]{0}', space=vmem, size = 0x1c000, scoped, tag = 'input window, operand 1, single buffered']
    #allocation5 [shape = 's32[1]{0}', space=sflag, size = 0x4, scoped, tag = 'scoped memory for tpu_custom_call.1']
    %7 = vsyncpa [#allocation3], 0
    %8 = vsyncpa [#allocation5], 0
    // Predicated region
    $region2: #{tpu_custom_call.1} parent=1 // pred_check
      _
    $region3: #{tpu_custom_call.1} parent=1 // pred_check_branch
      %10 = sbr.rel (0) target = $region5
    $region4: #{tpu_custom_call.1} parent=1 // pred_region
      %s12 = ssub.s32 64, 64
      %13 = vsyncadd [#allocation3], %s12
      %s15 = sshll.u32 [#allocation2], 4
      %s16 = int_to_ptr.vmem [resolvable:$true] %s15
      %18 = dma.hbm_to_vmem [thread:$0]  %s0, 64, %s16, [#allocation3]
    $region5: #{tpu_custom_call.1} parent=1 // pred_fallthru
      _
    // Predicated region
    $region6: #{tpu_custom_call.1} parent=1 // pred_check
      _
    $region7: #{tpu_custom_call.1} parent=1 // pred_check_branch
      %20 = sbr.rel (0) target = $region9
    $region8: #{tpu_custom_call.1} parent=1 // pred_region
      %s22 = ssub.s32 3584, 3584
      %23 = vsyncadd [#allocation5], %s22
      %s24 = sshll.u32 [#allocation4], 4
      %s25 = int_to_ptr.vmem [resolvable:$true] %s24
      %30 = dma.hbm_to_vmem [thread:$0]  %s1, 3584, %s25, [#allocation5], 896, 896, 56
    $region9: #{tpu_custom_call.1} parent=1 // pred_fallthru
      _
    // Predicated region
    $region10: #{tpu_custom_call.1} parent=1 // pred_check
      _
    $region11: #{tpu_custom_call.1} parent=1 // pred_check_branch
      %32 = sbr.rel (0) target = $region13
    $region12: #{tpu_custom_call.1} parent=1 // pred_region
      %33 = dma.done [#allocation3], 64
    $region13: #{tpu_custom_call.1} parent=1 // pred_fallthru
      _
    // Predicated region
    $region14: #{tpu_custom_call.1} parent=1 // pred_check
      _
    $region15: #{tpu_custom_call.1} parent=1 // pred_check_branch
      %35 = sbr.rel (0) target = $region17
    $region16: #{tpu_custom_call.1} parent=1 // pred_region
      %36 = dma.done [#allocation5], 3584
    $region17: #{tpu_custom_call.1} parent=1 // pred_fallthru
      _
    %v37 = vld [vmem:[#allocation2] sm:$0xf]
    %v38 = vld [vmem:[#allocation4] sm:$0xff]
    %v39 = vld [vmem:[#allocation4 + $0x38] sm:$0xff]
    %v40 = vld [vmem:[#allocation4 + $0x70] sm:$0xff]
    %v41 = vld [vmem:[#allocation4 + $0xa8] sm:$0xff]
    %v42 = vld [vmem:[#allocation4 + $0x8] sm:$0xff]
    %v43 = vld [vmem:[#allocation4 + $0x40] sm:$0xff]
    %v44 = vld [vmem:[#allocation4 + $0x78] sm:$0xff]
    %v45 = vld [vmem:[#allocation4 + $0xb0] sm:$0xff]
    %47 = vset.pattern.permute.xlu0 0
    %48 = vperm.xlu0 %47, %v42
    %v49 = vpop.permute.xlu0 %48
    %52 = vset.pattern.permute.xlu0 0
    %53 = vperm.xlu0 %52, %v43
    %v54 = vpop.permute.xlu0 %53
    %57 = vset.pattern.permute.xlu0 0
    %58 = vperm.xlu0 %57, %v44
    %v59 = vpop.permute.xlu0 %58
    %62 = vset.pattern.permute.xlu0 0
    %63 = vperm.xlu0 %62, %v45
    %v64 = vpop.permute.xlu0 %63
    %vm66 = vcmask 31744
    %v68 = vsel %vm66, %v38, 0
    %v71 = vsel %vm66, %v39, 0
    %v74 = vsel %vm66, %v40, 0
    %v77 = vsel %vm66, %v41, 0
    %vm79 = vcmask 1043456
    %v81 = vsel %vm79, %v37, 0
    %83 = vmatprep.subr.mxu0 0.0
    %84 = vmatpush1.msra.mxu0 %v81
    %85 = vmatprep.subr.mxu0 0.0
    %86 = vmatpush1.msra.mxu0 0.0
    %87 = vmatprep.subr.mxu0 0.0
    %88 = vmatpush1.msra.mxu0 0.0
    %89 = vmatprep.subr.mxu0 0.0
    %90 = vmatpush1.msra.mxu0 0.0
    %91 = vmatprep.subr.mxu0 0.0
    %92 = vmatpush1.msra.mxu0 0.0
    %93 = vmatprep.subr.mxu0 0.0
    %94 = vmatpush1.msra.mxu0 0.0
    %95 = vmatprep.subr.mxu0 0.0
    %96 = vmatpush1.msra.mxu0 0.0
    %97 = vmatprep.subr.mxu0 0.0
    %98 = vmatpush1.msra.mxu0 0.0
    %99 = vmatprep.subr.mxu0 0.0
    %100 = vmatpush1.msra.mxu0 0.0
    %101 = vmatprep.subr.mxu0 0.0
    %102 = vmatpush1.msra.mxu0 0.0
    %103 = vmatprep.subr.mxu0 0.0
    %104 = vmatpush1.msra.mxu0 0.0
    %105 = vmatprep.subr.mxu0 0.0
    %106 = vmatpush1.msra.mxu0 0.0
    %107 = vmatprep.subr.mxu0 0.0
    %108 = vmatpush1.msra.mxu0 0.0
    %109 = vmatprep.subr.mxu0 0.0
    %110 = vmatpush1.msra.mxu0 0.0
    %111 = vmatprep.subr.mxu0 0.0
    %112 = vmatpush1.msra.mxu0 0.0
    %113 = vmatprep.subr.mxu0 0.0
    %114 = vmatpush1.msra.mxu0 0.0
    %115 = vmatprep.subr.mxu0 0.0
    %116 = vmatpush1.msra.mxu0 0.0
    %117 = vmatprep.subr.mxu0 0.0
    %118 = vmatpush1.msra.mxu0 0.0
    %119 = vmatprep.subr.mxu0 0.0
    %120 = vmatpush1.msra.mxu0 0.0
    %121 = vmatprep.subr.mxu0 0.0
    %122 = vmatpush1.msra.mxu0 0.0
    %123 = vmatprep.subr.mxu0 0.0
    %124 = vmatpush1.msra.mxu0 0.0
    %125 = vmatprep.subr.mxu0 0.0
    %126 = vmatpush1.msra.mxu0 0.0
    %127 = vmatprep.subr.mxu0 0.0
    %128 = vmatpush1.msra.mxu0 0.0
    %129 = vmatprep.subr.mxu0 0.0
    %130 = vmatpush1.msra.mxu0 0.0
    %131 = vmatprep.subr.mxu0 0.0
    %132 = vmatpush1.msra.mxu0 0.0
    %133 = vmatprep.subr.mxu0 0.0
    %134 = vmatpush1.msra.mxu0 0.0
    %135 = vmatprep.subr.mxu0 0.0
    %136 = vmatpush1.msra.mxu0 0.0
    %137 = vmatprep.subr.mxu0 0.0
    %138 = vmatpush1.msra.mxu0 0.0
    %139 = vmatprep.subr.mxu0 0.0
    %140 = vmatpush1.msra.mxu0 0.0
    %141 = vmatprep.subr.mxu0 0.0
    %142 = vmatpush1.msra.mxu0 0.0
    %143 = vmatprep.subr.mxu0 0.0
    %144 = vmatpush1.msra.mxu0 0.0
    %145 = vmatprep.subr.mxu0 0.0
    %146 = vmatpush1.msra.mxu0 0.0
    %147 = vmatprep.mubr.f32.mxu0 0.0
    %148 = vmatmul.mubr.f32.gmra.mrb[0].mxu0 %v68
    %v149 = vpop.f32.mrb[0].mxu0
    %v150 = vadd.f32 %v49, %v149
    %v151 = vpop.f32.mrb[0].mxu0
    %152 = vmatprep.mubr.f32.mxu0 0.0
    %153 = vmatmul.mubr.f32.gmra.mrb[0].mxu0 %v71
    %v154 = vpop.f32.mrb[0].mxu0
    %v155 = vadd.f32 %v54, %v154
    %v156 = vpop.f32.mrb[0].mxu0
    %157 = vmatprep.mubr.f32.mxu0 0.0
    %158 = vmatmul.mubr.f32.gmra.mrb[0].mxu0 %v74
    %v159 = vpop.f32.mrb[0].mxu0
    %v160 = vadd.f32 %v59, %v159
    %v161 = vpop.f32.mrb[0].mxu0
    %162 = vmatprep.mubr.f32.mxu0 0.0
    %163 = vmatmul.mubr.f32.gmra.mrb[0].mxu0 %v77
    %v164 = vpop.f32.mrb[0].mxu0
    %v165 = vadd.f32 %v64, %v164
    %v166 = vpop.f32.mrb[0].mxu0
    %167 = vdwg.mxu0
    %v168 = vand.u32 2147483647, %v150
    %vm169 = vcmp.le.f32.partialorder %v168, 0.7853982
    %vm170 = vcmp.lt.s32.totalorder %v150, 0
    %v171 = vand.u32 %v150, 2139095040
    %v172 = vshrl.u32 %v171, 23
    %v173 = vsub.s32 %v172, 127
    %v174 = vand.u32 2147483647, %v150
    %v175 = vand.u32 %v174, 8388607
    %v176 = vor.u32 %v175, 8388608
    %v177 = vsub.s32 0, %v176
    %v178 = vadd.s32 %v173, 1
    %vm179 = vcmp.gt.s32.totalorder %v178, 0
    %v180 = vsel %vm179, %v178, 0
    %v181 = vshrl.u32 %v180, 5
    %v182 = vand.u32 %v180, 31
    %v183 = vsub.s32 32, %v182
    %v184 = vshrl.u32 683565275, %v183
    %v185 = vshll.u32 683565275, %v182
    %v186 = vshrl.u32 2475754826, %v183
    %v187 = vor.u32 %v185, %v186
    %v188 = vshll.u32 2475754826, %v182
    %v189 = vshrl.u32 2131351028, %v183
    %v190 = vor.u32 %v188, %v189
    %v191 = vshll.u32 2131351028, %v182
    %v192 = vshrl.u32 2102212464, %v183
    %v193 = vor.u32 %v191, %v192
    %v194 = vshll.u32 2102212464, %v182
    %v195 = vshrl.u32 920167782, %v183
    %v196 = vor.u32 %v194, %v195
    %v197 = vshll.u32 920167782, %v182
    %v198 = vshrl.u32 1326507024, %v183
    %v199 = vor.u32 %v197, %v198
    %vm200 = vcmp.lt.s32.totalorder %v181, 1
    %vm201 = vcmp.lt.s32.totalorder %v181, 2
    %vm202 = vcmp.lt.s32.totalorder %v181, 3
    %vm203 = vcmp.lt.s32.totalorder %v181, 4
    %v204 = vsel %vm200, %v184, %v187
    %v205 = vsel %vm203, %v193, 2102212464
    %v206 = vsel %vm202, %v190, %v205
    %v207 = vsel %vm201, %v204, %v206
    %v208 = vsel %vm200, %v187, %v190
    %v209 = vsel %vm203, %v196, 920167782
    %v210 = vsel %vm202, %v193, %v209
    %v211 = vsel %vm201, %v208, %v210
    %v212 = vsel %vm200, %v190, %v193
    %v213 = vsel %vm203, %v199, 1326507024
    %v214 = vsel %vm202, %v196, %v213
    %v215 = vsel %vm201, %v212, %v214
    %v216 = vshll.u32 %v176, 8
    %v217 = vmul.u32.u64.compose %v216, %v215
    %v218 = vextract.low.u32 %v217
    %v219 = vextract.high.u32 %v217
    %v220 = vmul.u32.u64.compose %v216, %v211
    %v221 = vextract.low.u32 %v220
    %v222 = vextract.high.u32 %v220
    %v223 = vmul.u32 %v216, %v207
    %v224 = vadd.s32 %v219, %v221
    %vm225 = vc.u32 %v219, %v221
    %v226 = vadd.s32 %v222, 1
    %v227 = vsel %vm225, %v226, %v222
    %v228 = vadd.s32 %v223, %v227
    %v229 = vadd.s32 %v228, 536870912
    %v230 = vshrl.u32 %v229, 30
    %v231 = vshll.u32 %v230, 30
    %v232 = vsub.s32 %v228, %v231
    %vm233 = vcmp.lt.s32.totalorder %v232, 0
    %v234 = vsub.s32 0, %v232
    %v235 = vsel %vm233, %v234, %v232
    %v236 = vclz %v235
    %v237 = vsub.s32 %v236, 2
    %vm238 = vcmp.gt.s32.totalorder 0, %v237
    %v239 = vsel %vm238, 0, %v237
    %v240 = vsub.s32 32, %v239
    %v241 = vshll.u32 %v232, %v239
    %v242 = vshrl.u32 %v224, %v240
    %v243 = vor.u32 %v241, %v242
    %v244 = vsub.s32 4294967266, %v239
    %v245 = vadd.s32 %v244, 127
    %v246 = vshll.u32 %v245, 23
    %v247 = vor.u32 4788187, %v246
    %v248 = vand.u32 2147483647, %v247
    %v250 = vcvt.s32.f32 %v243
    %v251 = vmul.f32 %v250, %v248
    %v252 = vxor.u32 %v251, 2147483648
    %v253 = vsel %vm170, %v252, %v251
    %v254 = vsub.s32 4, %v230
    %v255 = vsel %vm170, %v254, %v230
    %v256 = vsel %vm169, %v150, %v253
    %v257 = vsel %vm169, 0, %v255
    %v258 = vcosq.f32.pop %v256
    %v259 = vsinq.f32.pop %v256
    %vm260 = vweird.f32 %v150
    %v261 = vadd.s32 %v257, 3
    %v262 = vand.u32 %v261, 3
    %vm263 = vcmp.lt.s32.totalorder %v262, 2
    %vm264 = vcmp.eq.s32.totalorder %v262, 0
    %v265 = vxor.u32 %v259, 2147483648
    %v266 = vsel %vm264, %v258, %v265
    %vm267 = vcmp.eq.s32.totalorder %v262, 2
    %v268 = vxor.u32 %v258, 2147483648
    %v269 = vsel %vm267, %v268, %v259
    %v270 = vsel %vm263, %v266, %v269
    %v271 = vsel %vm260, nan, %v270
    %v272 = vand.u32 2147483647, %v155
    %vm273 = vcmp.le.f32.partialorder %v272, 0.7853982
    %vm274 = vcmp.lt.s32.totalorder %v155, 0
    %v275 = vand.u32 %v155, 2139095040
    %v276 = vshrl.u32 %v275, 23
    %v277 = vsub.s32 %v276, 127
    %v278 = vand.u32 2147483647, %v155
    %v279 = vand.u32 %v278, 8388607
    %v280 = vor.u32 %v279, 8388608
    %v281 = vsub.s32 0, %v280
    %v282 = vadd.s32 %v277, 1
    %vm283 = vcmp.gt.s32.totalorder %v282, 0
    %v284 = vsel %vm283, %v282, 0
    %v285 = vshrl.u32 %v284, 5
    %v286 = vand.u32 %v284, 31
    %v287 = vsub.s32 32, %v286
    %v288 = vshrl.u32 683565275, %v287
    %v289 = vshll.u32 683565275, %v286
    %v290 = vshrl.u32 2475754826, %v287
    %v291 = vor.u32 %v289, %v290
    %v292 = vshll.u32 2475754826, %v286
    %v293 = vshrl.u32 2131351028, %v287
    %v294 = vor.u32 %v292, %v293
    %v295 = vshll.u32 2131351028, %v286
    %v296 = vshrl.u32 2102212464, %v287
    %v297 = vor.u32 %v295, %v296
    %v298 = vshll.u32 2102212464, %v286
    %v299 = vshrl.u32 920167782, %v287
    %v300 = vor.u32 %v298, %v299
    %v301 = vshll.u32 920167782, %v286
    %v302 = vshrl.u32 1326507024, %v287
    %v303 = vor.u32 %v301, %v302
    %vm304 = vcmp.lt.s32.totalorder %v285, 1
    %vm305 = vcmp.lt.s32.totalorder %v285, 2
    %vm306 = vcmp.lt.s32.totalorder %v285, 3
    %vm307 = vcmp.lt.s32.totalorder %v285, 4
    %v308 = vsel %vm304, %v288, %v291
    %v309 = vsel %vm307, %v297, 2102212464
    %v310 = vsel %vm306, %v294, %v309
    %v311 = vsel %vm305, %v308, %v310
    %v312 = vsel %vm304, %v291, %v294
    %v313 = vsel %vm307, %v300, 920167782
    %v314 = vsel %vm306, %v297, %v313
    %v315 = vsel %vm305, %v312, %v314
    %v316 = vsel %vm304, %v294, %v297
    %v317 = vsel %vm307, %v303, 1326507024
    %v318 = vsel %vm306, %v300, %v317
    %v319 = vsel %vm305, %v316, %v318
    %v320 = vshll.u32 %v280, 8
    %v321 = vmul.u32.u64.compose %v320, %v319
    %v322 = vextract.low.u32 %v321
    %v323 = vextract.high.u32 %v321
    %v324 = vmul.u32.u64.compose %v320, %v315
    %v325 = vextract.low.u32 %v324
    %v326 = vextract.high.u32 %v324
    %v327 = vmul.u32 %v320, %v311
    %v328 = vadd.s32 %v323, %v325
    %vm329 = vc.u32 %v323, %v325
    %v330 = vadd.s32 %v326, 1
    %v331 = vsel %vm329, %v330, %v326
    %v332 = vadd.s32 %v327, %v331
    %v333 = vadd.s32 %v332, 536870912
    %v334 = vshrl.u32 %v333, 30
    %v335 = vshll.u32 %v334, 30
    %v336 = vsub.s32 %v332, %v335
    %vm337 = vcmp.lt.s32.totalorder %v336, 0
    %v338 = vsub.s32 0, %v336
    %v339 = vsel %vm337, %v338, %v336
    %v340 = vclz %v339
    %v341 = vsub.s32 %v340, 2
    %vm342 = vcmp.gt.s32.totalorder 0, %v341
    %v343 = vsel %vm342, 0, %v341
    %v344 = vsub.s32 32, %v343
    %v345 = vshll.u32 %v336, %v343
    %v346 = vshrl.u32 %v328, %v344
    %v347 = vor.u32 %v345, %v346
    %v348 = vsub.s32 4294967266, %v343
    %v349 = vadd.s32 %v348, 127
    %v350 = vshll.u32 %v349, 23
    %v351 = vor.u32 4788187, %v350
    %v352 = vand.u32 2147483647, %v351
    %v354 = vcvt.s32.f32 %v347
    %v355 = vmul.f32 %v354, %v352
    %v356 = vxor.u32 %v355, 2147483648
    %v357 = vsel %vm274, %v356, %v355
    %v358 = vsub.s32 4, %v334
    %v359 = vsel %vm274, %v358, %v334
    %v360 = vsel %vm273, %v155, %v357
    %v361 = vsel %vm273, 0, %v359
    %v362 = vcosq.f32.pop %v360
    %v363 = vsinq.f32.pop %v360
    %vm364 = vweird.f32 %v155
    %v365 = vadd.s32 %v361, 3
    %v366 = vand.u32 %v365, 3
    %vm367 = vcmp.lt.s32.totalorder %v366, 2
    %vm368 = vcmp.eq.s32.totalorder %v366, 0
    %v369 = vxor.u32 %v363, 2147483648
    %v370 = vsel %vm368, %v362, %v369
    %vm371 = vcmp.eq.s32.totalorder %v366, 2
    %v372 = vxor.u32 %v362, 2147483648
    %v373 = vsel %vm371, %v372, %v363
    %v374 = vsel %vm367, %v370, %v373
    %v375 = vsel %vm364, nan, %v374
    %v376 = vand.u32 2147483647, %v160
    %vm377 = vcmp.le.f32.partialorder %v376, 0.7853982
    %vm378 = vcmp.lt.s32.totalorder %v160, 0
    %v379 = vand.u32 %v160, 2139095040
    %v380 = vshrl.u32 %v379, 23
    %v381 = vsub.s32 %v380, 127
    %v382 = vand.u32 2147483647, %v160
    %v383 = vand.u32 %v382, 8388607
    %v384 = vor.u32 %v383, 8388608
    %v385 = vsub.s32 0, %v384
    %v386 = vadd.s32 %v381, 1
    %vm387 = vcmp.gt.s32.totalorder %v386, 0
    %v388 = vsel %vm387, %v386, 0
    %v389 = vshrl.u32 %v388, 5
    %v390 = vand.u32 %v388, 31
    %v391 = vsub.s32 32, %v390
    %v392 = vshrl.u32 683565275, %v391
    %v393 = vshll.u32 683565275, %v390
    %v394 = vshrl.u32 2475754826, %v391
    %v395 = vor.u32 %v393, %v394
    %v396 = vshll.u32 2475754826, %v390
    %v397 = vshrl.u32 2131351028, %v391
    %v398 = vor.u32 %v396, %v397
    %v399 = vshll.u32 2131351028, %v390
    %v400 = vshrl.u32 2102212464, %v391
    %v401 = vor.u32 %v399, %v400
    %v402 = vshll.u32 2102212464, %v390
    %v403 = vshrl.u32 920167782, %v391
    %v404 = vor.u32 %v402, %v403
    %v405 = vshll.u32 920167782, %v390
    %v406 = vshrl.u32 1326507024, %v391
    %v407 = vor.u32 %v405, %v406
    %vm408 = vcmp.lt.s32.totalorder %v389, 1
    %vm409 = vcmp.lt.s32.totalorder %v389, 2
    %vm410 = vcmp.lt.s32.totalorder %v389, 3
    %vm411 = vcmp.lt.s32.totalorder %v389, 4
    %v412 = vsel %vm408, %v392, %v395
    %v413 = vsel %vm411, %v401, 2102212464
    %v414 = vsel %vm410, %v398, %v413
    %v415 = vsel %vm409, %v412, %v414
    %v416 = vsel %vm408, %v395, %v398
    %v417 = vsel %vm411, %v404, 920167782
    %v418 = vsel %vm410, %v401, %v417
    %v419 = vsel %vm409, %v416, %v418
    %v420 = vsel %vm408, %v398, %v401
    %v421 = vsel %vm411, %v407, 1326507024
    %v422 = vsel %vm410, %v404, %v421
    %v423 = vsel %vm409, %v420, %v422
    %v424 = vshll.u32 %v384, 8
    %v425 = vmul.u32.u64.compose %v424, %v423
    %v426 = vextract.low.u32 %v425
    %v427 = vextract.high.u32 %v425
    %v428 = vmul.u32.u64.compose %v424, %v419
    %v429 = vextract.low.u32 %v428
    %v430 = vextract.high.u32 %v428
    %v431 = vmul.u32 %v424, %v415
    %v432 = vadd.s32 %v427, %v429
    %vm433 = vc.u32 %v427, %v429
    %v434 = vadd.s32 %v430, 1
    %v435 = vsel %vm433, %v434, %v430
    %v436 = vadd.s32 %v431, %v435
    %v437 = vadd.s32 %v436, 536870912
    %v438 = vshrl.u32 %v437, 30
    %v439 = vshll.u32 %v438, 30
    %v440 = vsub.s32 %v436, %v439
    %vm441 = vcmp.lt.s32.totalorder %v440, 0
    %v442 = vsub.s32 0, %v440
    %v443 = vsel %vm441, %v442, %v440
    %v444 = vclz %v443
    %v445 = vsub.s32 %v444, 2
    %vm446 = vcmp.gt.s32.totalorder 0, %v445
    %v447 = vsel %vm446, 0, %v445
    %v448 = vsub.s32 32, %v447
    %v449 = vshll.u32 %v440, %v447
    %v450 = vshrl.u32 %v432, %v448
    %v451 = vor.u32 %v449, %v450
    %v452 = vsub.s32 4294967266, %v447
    %v453 = vadd.s32 %v452, 127
    %v454 = vshll.u32 %v453, 23
    %v455 = vor.u32 4788187, %v454
    %v456 = vand.u32 2147483647, %v455
    %v458 = vcvt.s32.f32 %v451
    %v459 = vmul.f32 %v458, %v456
    %v460 = vxor.u32 %v459, 2147483648
    %v461 = vsel %vm378, %v460, %v459
    %v462 = vsub.s32 4, %v438
    %v463 = vsel %vm378, %v462, %v438
    %v464 = vsel %vm377, %v160, %v461
    %v465 = vsel %vm377, 0, %v463
    %v466 = vcosq.f32.pop %v464
    %v467 = vsinq.f32.pop %v464
    %vm468 = vweird.f32 %v160
    %v469 = vadd.s32 %v465, 3
    %v470 = vand.u32 %v469, 3
    %vm471 = vcmp.lt.s32.totalorder %v470, 2
    %vm472 = vcmp.eq.s32.totalorder %v470, 0
    %v473 = vxor.u32 %v467, 2147483648
    %v474 = vsel %vm472, %v466, %v473
    %vm475 = vcmp.eq.s32.totalorder %v470, 2
    %v476 = vxor.u32 %v466, 2147483648
    %v477 = vsel %vm475, %v476, %v467
    %v478 = vsel %vm471, %v474, %v477
    %v479 = vsel %vm468, nan, %v478
    %v480 = vand.u32 2147483647, %v165
    %vm481 = vcmp.le.f32.partialorder %v480, 0.7853982
    %vm482 = vcmp.lt.s32.totalorder %v165, 0
    %v483 = vand.u32 %v165, 2139095040
    %v484 = vshrl.u32 %v483, 23
    %v485 = vsub.s32 %v484, 127
    %v486 = vand.u32 2147483647, %v165
    %v487 = vand.u32 %v486, 8388607
    %v488 = vor.u32 %v487, 8388608
    %v489 = vsub.s32 0, %v488
    %v490 = vadd.s32 %v485, 1
    %vm491 = vcmp.gt.s32.totalorder %v490, 0
    %v492 = vsel %vm491, %v490, 0
    %v493 = vshrl.u32 %v492, 5
    %v494 = vand.u32 %v492, 31
    %v495 = vsub.s32 32, %v494
    %v496 = vshrl.u32 683565275, %v495
    %v497 = vshll.u32 683565275, %v494
    %v498 = vshrl.u32 2475754826, %v495
    %v499 = vor.u32 %v497, %v498
    %v500 = vshll.u32 2475754826, %v494
    %v501 = vshrl.u32 2131351028, %v495
    %v502 = vor.u32 %v500, %v501
    %v503 = vshll.u32 2131351028, %v494
    %v504 = vshrl.u32 2102212464, %v495
    %v505 = vor.u32 %v503, %v504
    %v506 = vshll.u32 2102212464, %v494
    %v507 = vshrl.u32 920167782, %v495
    %v508 = vor.u32 %v506, %v507
    %v509 = vshll.u32 920167782, %v494
    %v510 = vshrl.u32 1326507024, %v495
    %v511 = vor.u32 %v509, %v510
    %vm512 = vcmp.lt.s32.totalorder %v493, 1
    %vm513 = vcmp.lt.s32.totalorder %v493, 2
    %vm514 = vcmp.lt.s32.totalorder %v493, 3
    %vm515 = vcmp.lt.s32.totalorder %v493, 4
    %v516 = vsel %vm512, %v496, %v499
    %v517 = vsel %vm515, %v505, 2102212464
    %v518 = vsel %vm514, %v502, %v517
    %v519 = vsel %vm513, %v516, %v518
    %v520 = vsel %vm512, %v499, %v502
    %v521 = vsel %vm515, %v508, 920167782
    %v522 = vsel %vm514, %v505, %v521
    %v523 = vsel %vm513, %v520, %v522
    %v524 = vsel %vm512, %v502, %v505
    %v525 = vsel %vm515, %v511, 1326507024
    %v526 = vsel %vm514, %v508, %v525
    %v527 = vsel %vm513, %v524, %v526
    %v528 = vshll.u32 %v488, 8
    %v529 = vmul.u32.u64.compose %v528, %v527
    %v530 = vextract.low.u32 %v529
    %v531 = vextract.high.u32 %v529
    %v532 = vmul.u32.u64.compose %v528, %v523
    %v533 = vextract.low.u32 %v532
    %v534 = vextract.high.u32 %v532
    %v535 = vmul.u32 %v528, %v519
    %v536 = vadd.s32 %v531, %v533
    %vm537 = vc.u32 %v531, %v533
    %v538 = vadd.s32 %v534, 1
    %v539 = vsel %vm537, %v538, %v534
    %v540 = vadd.s32 %v535, %v539
    %v541 = vadd.s32 %v540, 536870912
    %v542 = vshrl.u32 %v541, 30
    %v543 = vshll.u32 %v542, 30
    %v544 = vsub.s32 %v540, %v543
    %vm545 = vcmp.lt.s32.totalorder %v544, 0
    %v546 = vsub.s32 0, %v544
    %v547 = vsel %vm545, %v546, %v544
    %v548 = vclz %v547
    %v549 = vsub.s32 %v548, 2
    %vm550 = vcmp.gt.s32.totalorder 0, %v549
    %v551 = vsel %vm550, 0, %v549
    %v552 = vsub.s32 32, %v551
    %v553 = vshll.u32 %v544, %v551
    %v554 = vshrl.u32 %v536, %v552
    %v555 = vor.u32 %v553, %v554
    %v556 = vsub.s32 4294967266, %v551
    %v557 = vadd.s32 %v556, 127
    %v558 = vshll.u32 %v557, 23
    %v559 = vor.u32 4788187, %v558
    %v560 = vand.u32 2147483647, %v559
    %v562 = vcvt.s32.f32 %v555
    %v563 = vmul.f32 %v562, %v560
    %v564 = vxor.u32 %v563, 2147483648
    %v565 = vsel %vm482, %v564, %v563
    %v566 = vsub.s32 4, %v542
    %v567 = vsel %vm482, %v566, %v542
    %v568 = vsel %vm481, %v165, %v565
    %v569 = vsel %vm481, 0, %v567
    %v570 = vcosq.f32.pop %v568
    %v571 = vsinq.f32.pop %v568
    %vm572 = vweird.f32 %v165
    %v573 = vadd.s32 %v569, 3
    %v574 = vand.u32 %v573, 3
    %vm575 = vcmp.lt.s32.totalorder %v574, 2
    %vm576 = vcmp.eq.s32.totalorder %v574, 0
    %v577 = vxor.u32 %v571, 2147483648
    %v578 = vsel %vm576, %v570, %v577
    %vm579 = vcmp.eq.s32.totalorder %v574, 2
    %v580 = vxor.u32 %v570, 2147483648
    %v581 = vsel %vm579, %v580, %v571
    %v582 = vsel %vm575, %v578, %v581
    %v583 = vsel %vm572, nan, %v582
    %v584 = vld [vmem:[#allocation4 + $0x10] sm:$0xff]
    %v585 = vld [vmem:[#allocation4 + $0x48] sm:$0xff]
    %v586 = vld [vmem:[#allocation4 + $0x80] sm:$0xff]
    %v587 = vld [vmem:[#allocation4 + $0xb8] sm:$0xff]
    %v588 = vld [vmem:[#allocation4 + $0x18] sm:$0xff]
    %v589 = vld [vmem:[#allocation4 + $0x50] sm:$0xff]
    %v590 = vld [vmem:[#allocation4 + $0x88] sm:$0xff]
    %v591 = vld [vmem:[#allocation4 + $0xc0] sm:$0xff]
    %593 = vset.pattern.permute.xlu0 0
    %594 = vperm.xlu0 %593, %v588
    %v595 = vpop.permute.xlu0 %594
    %598 = vset.pattern.permute.xlu0 0
    %599 = vperm.xlu0 %598, %v589
    %v600 = vpop.permute.xlu0 %599
    %603 = vset.pattern.permute.xlu0 0
    %604 = vperm.xlu0 %603, %v590
    %v605 = vpop.permute.xlu0 %604
    %608 = vset.pattern.permute.xlu0 0
    %609 = vperm.xlu0 %608, %v591
    %v610 = vpop.permute.xlu0 %609
    %vm612 = vcmask 261120
    %v614 = vsel %vm612, %v584, 0
    %v617 = vsel %vm612, %v585, 0
    %v620 = vsel %vm612, %v586, 0
    %v623 = vsel %vm612, %v587, 0
    %625 = vmatprep.subr.mxu0 0.0
    %626 = vmatpush1.msra.mxu0 %v271
    %627 = vmatprep.subr.mxu0 0.0
    %628 = vmatpush1.msra.mxu0 %v375
    %629 = vmatprep.subr.mxu0 0.0
    %630 = vmatpush1.msra.mxu0 %v479
    %631 = vmatprep.subr.mxu0 0.0
    %632 = vmatpush1.msra.mxu0 %v583
    %633 = vmatprep.subr.mxu0 0.0
    %634 = vmatpush1.msra.mxu0 0.0
    %635 = vmatprep.subr.mxu0 0.0
    %636 = vmatpush1.msra.mxu0 0.0
    %637 = vmatprep.subr.mxu0 0.0
    %638 = vmatpush1.msra.mxu0 0.0
    %639 = vmatprep.subr.mxu0 0.0
    %640 = vmatpush1.msra.mxu0 0.0
    %641 = vmatprep.subr.mxu0 0.0
    %642 = vmatpush1.msra.mxu0 0.0
    %643 = vmatprep.subr.mxu0 0.0
    %644 = vmatpush1.msra.mxu0 0.0
    %645 = vmatprep.subr.mxu0 0.0
    %646 = vmatpush1.msra.mxu0 0.0
    %647 = vmatprep.subr.mxu0 0.0
    %648 = vmatpush1.msra.mxu0 0.0
    %649 = vmatprep.subr.mxu0 0.0
    %650 = vmatpush1.msra.mxu0 0.0
    %651 = vmatprep.subr.mxu0 0.0
    %652 = vmatpush1.msra.mxu0 0.0
    %653 = vmatprep.subr.mxu0 0.0
    %654 = vmatpush1.msra.mxu0 0.0
    %655 = vmatprep.subr.mxu0 0.0
    %656 = vmatpush1.msra.mxu0 0.0
    %657 = vmatprep.subr.mxu0 0.0
    %658 = vmatpush1.msra.mxu0 0.0
    %659 = vmatprep.subr.mxu0 0.0
    %660 = vmatpush1.msra.mxu0 0.0
    %661 = vmatprep.subr.mxu0 0.0
    %662 = vmatpush1.msra.mxu0 0.0
    %663 = vmatprep.subr.mxu0 0.0
    %664 = vmatpush1.msra.mxu0 0.0
    %665 = vmatprep.subr.mxu0 0.0
    %666 = vmatpush1.msra.mxu0 0.0
    %667 = vmatprep.subr.mxu0 0.0
    %668 = vmatpush1.msra.mxu0 0.0
    %669 = vmatprep.subr.mxu0 0.0
    %670 = vmatpush1.msra.mxu0 0.0
    %671 = vmatprep.subr.mxu0 0.0
    %672 = vmatpush1.msra.mxu0 0.0
    %673 = vmatprep.subr.mxu0 0.0
    %674 = vmatpush1.msra.mxu0 0.0
    %675 = vmatprep.subr.mxu0 0.0
    %676 = vmatpush1.msra.mxu0 0.0
    %677 = vmatprep.subr.mxu0 0.0
    %678 = vmatpush1.msra.mxu0 0.0
    %679 = vmatprep.subr.mxu0 0.0
    %680 = vmatpush1.msra.mxu0 0.0
    %681 = vmatprep.subr.mxu0 0.0
    %682 = vmatpush1.msra.mxu0 0.0
    %683 = vmatprep.subr.mxu0 0.0
    %684 = vmatpush1.msra.mxu0 0.0
    %685 = vmatprep.subr.mxu0 0.0
    %686 = vmatpush1.msra.mxu0 0.0
    %687 = vmatprep.subr.mxu0 0.0
    %688 = vmatpush1.msra.mxu0 0.0
    %689 = vmatprep.mubr.f32.mxu0 0.0
    %690 = vmatmul.mubr.f32.gmra.mrb[0].mxu0 %v614
    %v691 = vpop.f32.mrb[0].mxu0
    %v692 = vadd.f32 %v595, %v691
    %v693 = vpop.f32.mrb[0].mxu0
    %694 = vmatprep.mubr.f32.mxu0 0.0
    %695 = vmatmul.mubr.f32.gmra.mrb[0].mxu0 %v617
    %v696 = vpop.f32.mrb[0].mxu0
    %v697 = vadd.f32 %v600, %v696
    %v698 = vpop.f32.mrb[0].mxu0
    %699 = vmatprep.mubr.f32.mxu0 0.0
    %700 = vmatmul.mubr.f32.gmra.mrb[0].mxu0 %v620
    %v701 = vpop.f32.mrb[0].mxu0
    %v702 = vadd.f32 %v605, %v701
    %v703 = vpop.f32.mrb[0].mxu0
    %704 = vmatprep.mubr.f32.mxu0 0.0
    %705 = vmatmul.mubr.f32.gmra.mrb[0].mxu0 %v623
    %v706 = vpop.f32.mrb[0].mxu0
    %v707 = vadd.f32 %v610, %v706
    %v708 = vpop.f32.mrb[0].mxu0
    %709 = vdwg.mxu0
    %v710 = vand.u32 2147483647, %v692
    %vm711 = vcmp.le.f32.partialorder %v710, 0.7853982
    %vm712 = vcmp.lt.s32.totalorder %v692, 0
    %v713 = vand.u32 %v692, 2139095040
    %v714 = vshrl.u32 %v713, 23
    %v715 = vsub.s32 %v714, 127
    %v716 = vand.u32 2147483647, %v692
    %v717 = vand.u32 %v716, 8388607
    %v718 = vor.u32 %v717, 8388608
    %v719 = vsub.s32 0, %v718
    %v720 = vadd.s32 %v715, 1
    %vm721 = vcmp.gt.s32.totalorder %v720, 0
    %v722 = vsel %vm721, %v720, 0
    %v723 = vshrl.u32 %v722, 5
    %v724 = vand.u32 %v722, 31
    %v725 = vsub.s32 32, %v724
    %v726 = vshrl.u32 683565275, %v725
    %v727 = vshll.u32 683565275, %v724
    %v728 = vshrl.u32 2475754826, %v725
    %v729 = vor.u32 %v727, %v728
    %v730 = vshll.u32 2475754826, %v724
    %v731 = vshrl.u32 2131351028, %v725
    %v732 = vor.u32 %v730, %v731
    %v733 = vshll.u32 2131351028, %v724
    %v734 = vshrl.u32 2102212464, %v725
    %v735 = vor.u32 %v733, %v734
    %v736 = vshll.u32 2102212464, %v724
    %v737 = vshrl.u32 920167782, %v725
    %v738 = vor.u32 %v736, %v737
    %v739 = vshll.u32 920167782, %v724
    %v740 = vshrl.u32 1326507024, %v725
    %v741 = vor.u32 %v739, %v740
    %vm742 = vcmp.lt.s32.totalorder %v723, 1
    %vm743 = vcmp.lt.s32.totalorder %v723, 2
    %vm744 = vcmp.lt.s32.totalorder %v723, 3
    %vm745 = vcmp.lt.s32.totalorder %v723, 4
    %v746 = vsel %vm742, %v726, %v729
    %v747 = vsel %vm745, %v735, 2102212464
    %v748 = vsel %vm744, %v732, %v747
    %v749 = vsel %vm743, %v746, %v748
    %v750 = vsel %vm742, %v729, %v732
    %v751 = vsel %vm745, %v738, 920167782
    %v752 = vsel %vm744, %v735, %v751
    %v753 = vsel %vm743, %v750, %v752
    %v754 = vsel %vm742, %v732, %v735
    %v755 = vsel %vm745, %v741, 1326507024
    %v756 = vsel %vm744, %v738, %v755
    %v757 = vsel %vm743, %v754, %v756
    %v758 = vshll.u32 %v718, 8
    %v759 = vmul.u32.u64.compose %v758, %v757
    %v760 = vextract.low.u32 %v759
    %v761 = vextract.high.u32 %v759
    %v762 = vmul.u32.u64.compose %v758, %v753
    %v763 = vextract.low.u32 %v762
    %v764 = vextract.high.u32 %v762
    %v765 = vmul.u32 %v758, %v749
    %v766 = vadd.s32 %v761, %v763
    %vm767 = vc.u32 %v761, %v763
    %v768 = vadd.s32 %v764, 1
    %v769 = vsel %vm767, %v768, %v764
    %v770 = vadd.s32 %v765, %v769
    %v771 = vadd.s32 %v770, 536870912
    %v772 = vshrl.u32 %v771, 30
    %v773 = vshll.u32 %v772, 30
    %v774 = vsub.s32 %v770, %v773
    %vm775 = vcmp.lt.s32.totalorder %v774, 0
    %v776 = vsub.s32 0, %v774
    %v777 = vsel %vm775, %v776, %v774
    %v778 = vclz %v777
    %v779 = vsub.s32 %v778, 2
    %vm780 = vcmp.gt.s32.totalorder 0, %v779
    %v781 = vsel %vm780, 0, %v779
    %v782 = vsub.s32 32, %v781
    %v783 = vshll.u32 %v774, %v781
    %v784 = vshrl.u32 %v766, %v782
    %v785 = vor.u32 %v783, %v784
    %v786 = vsub.s32 4294967266, %v781
    %v787 = vadd.s32 %v786, 127
    %v788 = vshll.u32 %v787, 23
    %v789 = vor.u32 4788187, %v788
    %v790 = vand.u32 2147483647, %v789
    %v792 = vcvt.s32.f32 %v785
    %v793 = vmul.f32 %v792, %v790
    %v794 = vxor.u32 %v793, 2147483648
    %v795 = vsel %vm712, %v794, %v793
    %v796 = vsub.s32 4, %v772
    %v797 = vsel %vm712, %v796, %v772
    %v798 = vsel %vm711, %v692, %v795
    %v799 = vsel %vm711, 0, %v797
    %v800 = vcosq.f32.pop %v798
    %v801 = vsinq.f32.pop %v798
    %vm802 = vweird.f32 %v692
    %v803 = vadd.s32 %v799, 3
    %v804 = vand.u32 %v803, 3
    %vm805 = vcmp.lt.s32.totalorder %v804, 2
    %vm806 = vcmp.eq.s32.totalorder %v804, 0
    %v807 = vxor.u32 %v801, 2147483648
    %v808 = vsel %vm806, %v800, %v807
    %vm809 = vcmp.eq.s32.totalorder %v804, 2
    %v810 = vxor.u32 %v800, 2147483648
    %v811 = vsel %vm809, %v810, %v801
    %v812 = vsel %vm805, %v808, %v811
    %v813 = vsel %vm802, nan, %v812
    %v814 = vand.u32 2147483647, %v697
    %vm815 = vcmp.le.f32.partialorder %v814, 0.7853982
    %vm816 = vcmp.lt.s32.totalorder %v697, 0
    %v817 = vand.u32 %v697, 2139095040
    %v818 = vshrl.u32 %v817, 23
    %v819 = vsub.s32 %v818, 127
    %v820 = vand.u32 2147483647, %v697
    %v821 = vand.u32 %v820, 8388607
    %v822 = vor.u32 %v821, 8388608
    %v823 = vsub.s32 0, %v822
    %v824 = vadd.s32 %v819, 1
    %vm825 = vcmp.gt.s32.totalorder %v824, 0
    %v826 = vsel %vm825, %v824, 0
    %v827 = vshrl.u32 %v826, 5
    %v828 = vand.u32 %v826, 31
    %v829 = vsub.s32 32, %v828
    %v830 = vshrl.u32 683565275, %v829
    %v831 = vshll.u32 683565275, %v828
    %v832 = vshrl.u32 2475754826, %v829
    %v833 = vor.u32 %v831, %v832
    %v834 = vshll.u32 2475754826, %v828
    %v835 = vshrl.u32 2131351028, %v829
    %v836 = vor.u32 %v834, %v835
    %v837 = vshll.u32 2131351028, %v828
    %v838 = vshrl.u32 2102212464, %v829
    %v839 = vor.u32 %v837, %v838
    %v840 = vshll.u32 2102212464, %v828
    %v841 = vshrl.u32 920167782, %v829
    %v842 = vor.u32 %v840, %v841
    %v843 = vshll.u32 920167782, %v828
    %v844 = vshrl.u32 1326507024, %v829
    %v845 = vor.u32 %v843, %v844
    %vm846 = vcmp.lt.s32.totalorder %v827, 1
    %vm847 = vcmp.lt.s32.totalorder %v827, 2
    %vm848 = vcmp.lt.s32.totalorder %v827, 3
    %vm849 = vcmp.lt.s32.totalorder %v827, 4
    %v850 = vsel %vm846, %v830, %v833
    %v851 = vsel %vm849, %v839, 2102212464
    %v852 = vsel %vm848, %v836, %v851
    %v853 = vsel %vm847, %v850, %v852
    %v854 = vsel %vm846, %v833, %v836
    %v855 = vsel %vm849, %v842, 920167782
    %v856 = vsel %vm848, %v839, %v855
    %v857 = vsel %vm847, %v854, %v856
    %v858 = vsel %vm846, %v836, %v839
    %v859 = vsel %vm849, %v845, 1326507024
    %v860 = vsel %vm848, %v842, %v859
    %v861 = vsel %vm847, %v858, %v860
    %v862 = vshll.u32 %v822, 8
    %v863 = vmul.u32.u64.compose %v862, %v861
    %v864 = vextract.low.u32 %v863
    %v865 = vextract.high.u32 %v863
    %v866 = vmul.u32.u64.compose %v862, %v857
    %v867 = vextract.low.u32 %v866
    %v868 = vextract.high.u32 %v866
    %v869 = vmul.u32 %v862, %v853
    %v870 = vadd.s32 %v865, %v867
    %vm871 = vc.u32 %v865, %v867
    %v872 = vadd.s32 %v868, 1
    %v873 = vsel %vm871, %v872, %v868
    %v874 = vadd.s32 %v869, %v873
    %v875 = vadd.s32 %v874, 536870912
    %v876 = vshrl.u32 %v875, 30
    %v877 = vshll.u32 %v876, 30
    %v878 = vsub.s32 %v874, %v877
    %vm879 = vcmp.lt.s32.totalorder %v878, 0
    %v880 = vsub.s32 0, %v878
    %v881 = vsel %vm879, %v880, %v878
    %v882 = vclz %v881
    %v883 = vsub.s32 %v882, 2
    %vm884 = vcmp.gt.s32.totalorder 0, %v883
    %v885 = vsel %vm884, 0, %v883
    %v886 = vsub.s32 32, %v885
    %v887 = vshll.u32 %v878, %v885
    %v888 = vshrl.u32 %v870, %v886
    %v889 = vor.u32 %v887, %v888
    %v890 = vsub.s32 4294967266, %v885
    %v891 = vadd.s32 %v890, 127
    %v892 = vshll.u32 %v891, 23
    %v893 = vor.u32 4788187, %v892
    %v894 = vand.u32 2147483647, %v893
    %v896 = vcvt.s32.f32 %v889
    %v897 = vmul.f32 %v896, %v894
    %v898 = vxor.u32 %v897, 2147483648
    %v899 = vsel %vm816, %v898, %v897
    %v900 = vsub.s32 4, %v876
    %v901 = vsel %vm816, %v900, %v876
    %v902 = vsel %vm815, %v697, %v899
    %v903 = vsel %vm815, 0, %v901
    %v904 = vcosq.f32.pop %v902
    %v905 = vsinq.f32.pop %v902
    %vm906 = vweird.f32 %v697
    %v907 = vadd.s32 %v903, 3
    %v908 = vand.u32 %v907, 3
    %vm909 = vcmp.lt.s32.totalorder %v908, 2
    %vm910 = vcmp.eq.s32.totalorder %v908, 0
    %v911 = vxor.u32 %v905, 2147483648
    %v912 = vsel %vm910, %v904, %v911
    %vm913 = vcmp.eq.s32.totalorder %v908, 2
    %v914 = vxor.u32 %v904, 2147483648
    %v915 = vsel %vm913, %v914, %v905
    %v916 = vsel %vm909, %v912, %v915
    %v917 = vsel %vm906, nan, %v916
    %v918 = vand.u32 2147483647, %v702
    %vm919 = vcmp.le.f32.partialorder %v918, 0.7853982
    %vm920 = vcmp.lt.s32.totalorder %v702, 0
    %v921 = vand.u32 %v702, 2139095040
    %v922 = vshrl.u32 %v921, 23
    %v923 = vsub.s32 %v922, 127
    %v924 = vand.u32 2147483647, %v702
    %v925 = vand.u32 %v924, 8388607
    %v926 = vor.u32 %v925, 8388608
    %v927 = vsub.s32 0, %v926
    %v928 = vadd.s32 %v923, 1
    %vm929 = vcmp.gt.s32.totalorder %v928, 0
    %v930 = vsel %vm929, %v928, 0
    %v931 = vshrl.u32 %v930, 5
    %v932 = vand.u32 %v930, 31
    %v933 = vsub.s32 32, %v932
    %v934 = vshrl.u32 683565275, %v933
    %v935 = vshll.u32 683565275, %v932
    %v936 = vshrl.u32 2475754826, %v933
    %v937 = vor.u32 %v935, %v936
    %v938 = vshll.u32 2475754826, %v932
    %v939 = vshrl.u32 2131351028, %v933
    %v940 = vor.u32 %v938, %v939
    %v941 = vshll.u32 2131351028, %v932
    %v942 = vshrl.u32 2102212464, %v933
    %v943 = vor.u32 %v941, %v942
    %v944 = vshll.u32 2102212464, %v932
    %v945 = vshrl.u32 920167782, %v933
    %v946 = vor.u32 %v944, %v945
    %v947 = vshll.u32 920167782, %v932
    %v948 = vshrl.u32 1326507024, %v933
    %v949 = vor.u32 %v947, %v948
    %vm950 = vcmp.lt.s32.totalorder %v931, 1
    %vm951 = vcmp.lt.s32.totalorder %v931, 2
    %vm952 = vcmp.lt.s32.totalorder %v931, 3
    %vm953 = vcmp.lt.s32.totalorder %v931, 4
    %v954 = vsel %vm950, %v934, %v937
    %v955 = vsel %vm953, %v943, 2102212464
    %v956 = vsel %vm952, %v940, %v955
    %v957 = vsel %vm951, %v954, %v956
    %v958 = vsel %vm950, %v937, %v940
    %v959 = vsel %vm953, %v946, 920167782
    %v960 = vsel %vm952, %v943, %v959
    %v961 = vsel %vm951, %v958, %v960
    %v962 = vsel %vm950, %v940, %v943
    %v963 = vsel %vm953, %v949, 1326507024
    %v964 = vsel %vm952, %v946, %v963
    %v965 = vsel %vm951, %v962, %v964
    %v966 = vshll.u32 %v926, 8
    %v967 = vmul.u32.u64.compose %v966, %v965
    %v968 = vextract.low.u32 %v967
    %v969 = vextract.high.u32 %v967
    %v970 = vmul.u32.u64.compose %v966, %v961
    %v971 = vextract.low.u32 %v970
    %v972 = vextract.high.u32 %v970
    %v973 = vmul.u32 %v966, %v957
    %v974 = vadd.s32 %v969, %v971
    %vm975 = vc.u32 %v969, %v971
    %v976 = vadd.s32 %v972, 1
    %v977 = vsel %vm975, %v976, %v972
    %v978 = vadd.s32 %v973, %v977
    %v979 = vadd.s32 %v978, 536870912
    %v980 = vshrl.u32 %v979, 30
    %v981 = vshll.u32 %v980, 30
    %v982 = vsub.s32 %v978, %v981
    %vm983 = vcmp.lt.s32.totalorder %v982, 0
    %v984 = vsub.s32 0, %v982
    %v985 = vsel %vm983, %v984, %v982
    %v986 = vclz %v985
    %v987 = vsub.s32 %v986, 2
    %vm988 = vcmp.gt.s32.totalorder 0, %v987
    %v989 = vsel %vm988, 0, %v987
    %v990 = vsub.s32 32, %v989
    %v991 = vshll.u32 %v982, %v989
    %v992 = vshrl.u32 %v974, %v990
    %v993 = vor.u32 %v991, %v992
    %v994 = vsub.s32 4294967266, %v989
    %v995 = vadd.s32 %v994, 127
    %v996 = vshll.u32 %v995, 23
    %v997 = vor.u32 4788187, %v996
    %v998 = vand.u32 2147483647, %v997
    %v1000 = vcvt.s32.f32 %v993
    %v1001 = vmul.f32 %v1000, %v998
    %v1002 = vxor.u32 %v1001, 2147483648
    %v1003 = vsel %vm920, %v1002, %v1001
    %v1004 = vsub.s32 4, %v980
    %v1005 = vsel %vm920, %v1004, %v980
    %v1006 = vsel %vm919, %v702, %v1003
    %v1007 = vsel %vm919, 0, %v1005
    %v1008 = vcosq.f32.pop %v1006
    %v1009 = vsinq.f32.pop %v1006
    %vm1010 = vweird.f32 %v702
    %v1011 = vadd.s32 %v1007, 3
    %v1012 = vand.u32 %v1011, 3
    %vm1013 = vcmp.lt.s32.totalorder %v1012, 2
    %vm1014 = vcmp.eq.s32.totalorder %v1012, 0
    %v1015 = vxor.u32 %v1009, 2147483648
    %v1016 = vsel %vm1014, %v1008, %v1015
    %vm1017 = vcmp.eq.s32.totalorder %v1012, 2
    %v1018 = vxor.u32 %v1008, 2147483648
    %v1019 = vsel %vm1017, %v1018, %v1009
    %v1020 = vsel %vm1013, %v1016, %v1019
    %v1021 = vsel %vm1010, nan, %v1020
    %v1022 = vand.u32 2147483647, %v707
    %vm1023 = vcmp.le.f32.partialorder %v1022, 0.7853982
    %vm1024 = vcmp.lt.s32.totalorder %v707, 0
    %v1025 = vand.u32 %v707, 2139095040
    %v1026 = vshrl.u32 %v1025, 23
    %v1027 = vsub.s32 %v1026, 127
    %v1028 = vand.u32 2147483647, %v707
    %v1029 = vand.u32 %v1028, 8388607
    %v1030 = vor.u32 %v1029, 8388608
    %v1031 = vsub.s32 0, %v1030
    %v1032 = vadd.s32 %v1027, 1
    %vm1033 = vcmp.gt.s32.totalorder %v1032, 0
    %v1034 = vsel %vm1033, %v1032, 0
    %v1035 = vshrl.u32 %v1034, 5
    %v1036 = vand.u32 %v1034, 31
    %v1037 = vsub.s32 32, %v1036
    %v1038 = vshrl.u32 683565275, %v1037
    %v1039 = vshll.u32 683565275, %v1036
    %v1040 = vshrl.u32 2475754826, %v1037
    %v1041 = vor.u32 %v1039, %v1040
    %v1042 = vshll.u32 2475754826, %v1036
    %v1043 = vshrl.u32 2131351028, %v1037
    %v1044 = vor.u32 %v1042, %v1043
    %v1045 = vshll.u32 2131351028, %v1036
    %v1046 = vshrl.u32 2102212464, %v1037
    %v1047 = vor.u32 %v1045, %v1046
    %v1048 = vshll.u32 2102212464, %v1036
    %v1049 = vshrl.u32 920167782, %v1037
    %v1050 = vor.u32 %v1048, %v1049
    %v1051 = vshll.u32 920167782, %v1036
    %v1052 = vshrl.u32 1326507024, %v1037
    %v1053 = vor.u32 %v1051, %v1052
    %vm1054 = vcmp.lt.s32.totalorder %v1035, 1
    %vm1055 = vcmp.lt.s32.totalorder %v1035, 2
    %vm1056 = vcmp.lt.s32.totalorder %v1035, 3
    %vm1057 = vcmp.lt.s32.totalorder %v1035, 4
    %v1058 = vsel %vm1054, %v1038, %v1041
    %v1059 = vsel %vm1057, %v1047, 2102212464
    %v1060 = vsel %vm1056, %v1044, %v1059
    %v1061 = vsel %vm1055, %v1058, %v1060
    %v1062 = vsel %vm1054, %v1041, %v1044
    %v1063 = vsel %vm1057, %v1050, 920167782
    %v1064 = vsel %vm1056, %v1047, %v1063
    %v1065 = vsel %vm1055, %v1062, %v1064
    %v1066 = vsel %vm1054, %v1044, %v1047
    %v1067 = vsel %vm1057, %v1053, 1326507024
    %v1068 = vsel %vm1056, %v1050, %v1067
    %v1069 = vsel %vm1055, %v1066, %v1068
    %v1070 = vshll.u32 %v1030, 8
    %v1071 = vmul.u32.u64.compose %v1070, %v1069
    %v1072 = vextract.low.u32 %v1071
    %v1073 = vextract.high.u32 %v1071
    %v1074 = vmul.u32.u64.compose %v1070, %v1065
    %v1075 = vextract.low.u32 %v1074
    %v1076 = vextract.high.u32 %v1074
    %v1077 = vmul.u32 %v1070, %v1061
    %v1078 = vadd.s32 %v1073, %v1075
    %vm1079 = vc.u32 %v1073, %v1075
    %v1080 = vadd.s32 %v1076, 1
    %v1081 = vsel %vm1079, %v1080, %v1076
    %v1082 = vadd.s32 %v1077, %v1081
    %v1083 = vadd.s32 %v1082, 536870912
    %v1084 = vshrl.u32 %v1083, 30
    %v1085 = vshll.u32 %v1084, 30
    %v1086 = vsub.s32 %v1082, %v1085
    %vm1087 = vcmp.lt.s32.totalorder %v1086, 0
    %v1088 = vsub.s32 0, %v1086
    %v1089 = vsel %vm1087, %v1088, %v1086
    %v1090 = vclz %v1089
    %v1091 = vsub.s32 %v1090, 2
    %vm1092 = vcmp.gt.s32.totalorder 0, %v1091
    %v1093 = vsel %vm1092, 0, %v1091
    %v1094 = vsub.s32 32, %v1093
    %v1095 = vshll.u32 %v1086, %v1093
    %v1096 = vshrl.u32 %v1078, %v1094
    %v1097 = vor.u32 %v1095, %v1096
    %v1098 = vsub.s32 4294967266, %v1093
    %v1099 = vadd.s32 %v1098, 127
    %v1100 = vshll.u32 %v1099, 23
    %v1101 = vor.u32 4788187, %v1100
    %v1102 = vand.u32 2147483647, %v1101
    %v1104 = vcvt.s32.f32 %v1097
    %v1105 = vmul.f32 %v1104, %v1102
    %v1106 = vxor.u32 %v1105, 2147483648
    %v1107 = vsel %vm1024, %v1106, %v1105
    %v1108 = vsub.s32 4, %v1084
    %v1109 = vsel %vm1024, %v1108, %v1084
    %v1110 = vsel %vm1023, %v707, %v1107
    %v1111 = vsel %vm1023, 0, %v1109
    %v1112 = vcosq.f32.pop %v1110
    %v1113 = vsinq.f32.pop %v1110
    %vm1114 = vweird.f32 %v707
    %v1115 = vadd.s32 %v1111, 3
    %v1116 = vand.u32 %v1115, 3
    %vm1117 = vcmp.lt.s32.totalorder %v1116, 2
    %vm1118 = vcmp.eq.s32.totalorder %v1116, 0
    %v1119 = vxor.u32 %v1113, 2147483648
    %v1120 = vsel %vm1118, %v1112, %v1119
    %vm1121 = vcmp.eq.s32.totalorder %v1116, 2
    %v1122 = vxor.u32 %v1112, 2147483648
    %v1123 = vsel %vm1121, %v1122, %v1113
    %v1124 = vsel %vm1117, %v1120, %v1123
    %v1125 = vsel %vm1114, nan, %v1124
    %v1126 = vld [vmem:[#allocation4 + $0x20] sm:$0xff]
    %v1127 = vld [vmem:[#allocation4 + $0x58] sm:$0xff]
    %v1128 = vld [vmem:[#allocation4 + $0x90] sm:$0xff]
    %v1129 = vld [vmem:[#allocation4 + $0xc8] sm:$0xff]
    %v1130 = vld [vmem:[#allocation4 + $0x28] sm:$0xff]
    %v1131 = vld [vmem:[#allocation4 + $0x60] sm:$0xff]
    %v1132 = vld [vmem:[#allocation4 + $0x98] sm:$0xff]
    %v1133 = vld [vmem:[#allocation4 + $0xd0] sm:$0xff]
    %1135 = vset.pattern.permute.xlu0 0
    %1136 = vperm.xlu0 %1135, %v1130
    %v1137 = vpop.permute.xlu0 %1136
    %1140 = vset.pattern.permute.xlu0 0
    %1141 = vperm.xlu0 %1140, %v1131
    %v1142 = vpop.permute.xlu0 %1141
    %1145 = vset.pattern.permute.xlu0 0
    %1146 = vperm.xlu0 %1145, %v1132
    %v1147 = vpop.permute.xlu0 %1146
    %1150 = vset.pattern.permute.xlu0 0
    %1151 = vperm.xlu0 %1150, %v1133
    %v1152 = vpop.permute.xlu0 %1151
    %v1155 = vsel %vm612, %v1126, 0
    %v1158 = vsel %vm612, %v1127, 0
    %v1161 = vsel %vm612, %v1128, 0
    %v1164 = vsel %vm612, %v1129, 0
    %1166 = vmatprep.subr.mxu0 0.0
    %1167 = vmatpush1.msra.mxu0 %v813
    %1168 = vmatprep.subr.mxu0 0.0
    %1169 = vmatpush1.msra.mxu0 %v917
    %1170 = vmatprep.subr.mxu0 0.0
    %1171 = vmatpush1.msra.mxu0 %v1021
    %1172 = vmatprep.subr.mxu0 0.0
    %1173 = vmatpush1.msra.mxu0 %v1125
    %1174 = vmatprep.subr.mxu0 0.0
    %1175 = vmatpush1.msra.mxu0 0.0
    %1176 = vmatprep.subr.mxu0 0.0
    %1177 = vmatpush1.msra.mxu0 0.0
    %1178 = vmatprep.subr.mxu0 0.0
    %1179 = vmatpush1.msra.mxu0 0.0
    %1180 = vmatprep.subr.mxu0 0.0
    %1181 = vmatpush1.msra.mxu0 0.0
    %1182 = vmatprep.subr.mxu0 0.0
    %1183 = vmatpush1.msra.mxu0 0.0
    %1184 = vmatprep.subr.mxu0 0.0
    %1185 = vmatpush1.msra.mxu0 0.0
    %1186 = vmatprep.subr.mxu0 0.0
    %1187 = vmatpush1.msra.mxu0 0.0
    %1188 = vmatprep.subr.mxu0 0.0
    %1189 = vmatpush1.msra.mxu0 0.0
    %1190 = vmatprep.subr.mxu0 0.0
    %1191 = vmatpush1.msra.mxu0 0.0
    %1192 = vmatprep.subr.mxu0 0.0
    %1193 = vmatpush1.msra.mxu0 0.0
    %1194 = vmatprep.subr.mxu0 0.0
    %1195 = vmatpush1.msra.mxu0 0.0
    %1196 = vmatprep.subr.mxu0 0.0
    %1197 = vmatpush1.msra.mxu0 0.0
    %1198 = vmatprep.subr.mxu0 0.0
    %1199 = vmatpush1.msra.mxu0 0.0
    %1200 = vmatprep.subr.mxu0 0.0
    %1201 = vmatpush1.msra.mxu0 0.0
    %1202 = vmatprep.subr.mxu0 0.0
    %1203 = vmatpush1.msra.mxu0 0.0
    %1204 = vmatprep.subr.mxu0 0.0
    %1205 = vmatpush1.msra.mxu0 0.0
    %1206 = vmatprep.subr.mxu0 0.0
    %1207 = vmatpush1.msra.mxu0 0.0
    %1208 = vmatprep.subr.mxu0 0.0
    %1209 = vmatpush1.msra.mxu0 0.0
    %1210 = vmatprep.subr.mxu0 0.0
    %1211 = vmatpush1.msra.mxu0 0.0
    %1212 = vmatprep.subr.mxu0 0.0
    %1213 = vmatpush1.msra.mxu0 0.0
    %1214 = vmatprep.subr.mxu0 0.0
    %1215 = vmatpush1.msra.mxu0 0.0
    %1216 = vmatprep.subr.mxu0 0.0
    %1217 = vmatpush1.msra.mxu0 0.0
    %1218 = vmatprep.subr.mxu0 0.0
    %1219 = vmatpush1.msra.mxu0 0.0
    %1220 = vmatprep.subr.mxu0 0.0
    %1221 = vmatpush1.msra.mxu0 0.0
    %1222 = vmatprep.subr.mxu0 0.0
    %1223 = vmatpush1.msra.mxu0 0.0
    %1224 = vmatprep.subr.mxu0 0.0
    %1225 = vmatpush1.msra.mxu0 0.0
    %1226 = vmatprep.subr.mxu0 0.0
    %1227 = vmatpush1.msra.mxu0 0.0
    %1228 = vmatprep.subr.mxu0 0.0
    %1229 = vmatpush1.msra.mxu0 0.0
    %1230 = vmatprep.mubr.f32.mxu0 0.0
    %1231 = vmatmul.mubr.f32.gmra.mrb[0].mxu0 %v1155
    %v1232 = vpop.f32.mrb[0].mxu0
    %v1233 = vadd.f32 %v1137, %v1232
    %v1234 = vpop.f32.mrb[0].mxu0
    %1235 = vmatprep.mubr.f32.mxu0 0.0
    %1236 = vmatmul.mubr.f32.gmra.mrb[0].mxu0 %v1158
    %v1237 = vpop.f32.mrb[0].mxu0
    %v1238 = vadd.f32 %v1142, %v1237
    %v1239 = vpop.f32.mrb[0].mxu0
    %1240 = vmatprep.mubr.f32.mxu0 0.0
    %1241 = vmatmul.mubr.f32.gmra.mrb[0].mxu0 %v1161
    %v1242 = vpop.f32.mrb[0].mxu0
    %v1243 = vadd.f32 %v1147, %v1242
    %v1244 = vpop.f32.mrb[0].mxu0
    %1245 = vmatprep.mubr.f32.mxu0 0.0
    %1246 = vmatmul.mubr.f32.gmra.mrb[0].mxu0 %v1164
    %v1247 = vpop.f32.mrb[0].mxu0
    %v1248 = vadd.f32 %v1152, %v1247
    %v1249 = vpop.f32.mrb[0].mxu0
    %1250 = vdwg.mxu0
    %v1251 = vand.u32 2147483647, %v1233
    %vm1252 = vcmp.le.f32.partialorder %v1251, 0.7853982
    %vm1253 = vcmp.lt.s32.totalorder %v1233, 0
    %v1254 = vand.u32 %v1233, 2139095040
    %v1255 = vshrl.u32 %v1254, 23
    %v1256 = vsub.s32 %v1255, 127
    %v1257 = vand.u32 2147483647, %v1233
    %v1258 = vand.u32 %v1257, 8388607
    %v1259 = vor.u32 %v1258, 8388608
    %v1260 = vsub.s32 0, %v1259
    %v1261 = vadd.s32 %v1256, 1
    %vm1262 = vcmp.gt.s32.totalorder %v1261, 0
    %v1263 = vsel %vm1262, %v1261, 0
    %v1264 = vshrl.u32 %v1263, 5
    %v1265 = vand.u32 %v1263, 31
    %v1266 = vsub.s32 32, %v1265
    %v1267 = vshrl.u32 683565275, %v1266
    %v1268 = vshll.u32 683565275, %v1265
    %v1269 = vshrl.u32 2475754826, %v1266
    %v1270 = vor.u32 %v1268, %v1269
    %v1271 = vshll.u32 2475754826, %v1265
    %v1272 = vshrl.u32 2131351028, %v1266
    %v1273 = vor.u32 %v1271, %v1272
    %v1274 = vshll.u32 2131351028, %v1265
    %v1275 = vshrl.u32 2102212464, %v1266
    %v1276 = vor.u32 %v1274, %v1275
    %v1277 = vshll.u32 2102212464, %v1265
    %v1278 = vshrl.u32 920167782, %v1266
    %v1279 = vor.u32 %v1277, %v1278
    %v1280 = vshll.u32 920167782, %v1265
    %v1281 = vshrl.u32 1326507024, %v1266
    %v1282 = vor.u32 %v1280, %v1281
    %vm1283 = vcmp.lt.s32.totalorder %v1264, 1
    %vm1284 = vcmp.lt.s32.totalorder %v1264, 2
    %vm1285 = vcmp.lt.s32.totalorder %v1264, 3
    %vm1286 = vcmp.lt.s32.totalorder %v1264, 4
    %v1287 = vsel %vm1283, %v1267, %v1270
    %v1288 = vsel %vm1286, %v1276, 2102212464
    %v1289 = vsel %vm1285, %v1273, %v1288
    %v1290 = vsel %vm1284, %v1287, %v1289
    %v1291 = vsel %vm1283, %v1270, %v1273
    %v1292 = vsel %vm1286, %v1279, 920167782
    %v1293 = vsel %vm1285, %v1276, %v1292
    %v1294 = vsel %vm1284, %v1291, %v1293
    %v1295 = vsel %vm1283, %v1273, %v1276
    %v1296 = vsel %vm1286, %v1282, 1326507024
    %v1297 = vsel %vm1285, %v1279, %v1296
    %v1298 = vsel %vm1284, %v1295, %v1297
    %v1299 = vshll.u32 %v1259, 8
    %v1300 = vmul.u32.u64.compose %v1299, %v1298
    %v1301 = vextract.low.u32 %v1300
    %v1302 = vextract.high.u32 %v1300
    %v1303 = vmul.u32.u64.compose %v1299, %v1294
    %v1304 = vextract.low.u32 %v1303
    %v1305 = vextract.high.u32 %v1303
    %v1306 = vmul.u32 %v1299, %v1290
    %v1307 = vadd.s32 %v1302, %v1304
    %vm1308 = vc.u32 %v1302, %v1304
    %v1309 = vadd.s32 %v1305, 1
    %v1310 = vsel %vm1308, %v1309, %v1305
    %v1311 = vadd.s32 %v1306, %v1310
    %v1312 = vadd.s32 %v1311, 536870912
    %v1313 = vshrl.u32 %v1312, 30
    %v1314 = vshll.u32 %v1313, 30
    %v1315 = vsub.s32 %v1311, %v1314
    %vm1316 = vcmp.lt.s32.totalorder %v1315, 0
    %v1317 = vsub.s32 0, %v1315
    %v1318 = vsel %vm1316, %v1317, %v1315
    %v1319 = vclz %v1318
    %v1320 = vsub.s32 %v1319, 2
    %vm1321 = vcmp.gt.s32.totalorder 0, %v1320
    %v1322 = vsel %vm1321, 0, %v1320
    %v1323 = vsub.s32 32, %v1322
    %v1324 = vshll.u32 %v1315, %v1322
    %v1325 = vshrl.u32 %v1307, %v1323
    %v1326 = vor.u32 %v1324, %v1325
    %v1327 = vsub.s32 4294967266, %v1322
    %v1328 = vadd.s32 %v1327, 127
    %v1329 = vshll.u32 %v1328, 23
    %v1330 = vor.u32 4788187, %v1329
    %v1331 = vand.u32 2147483647, %v1330
    %v1333 = vcvt.s32.f32 %v1326
    %v1334 = vmul.f32 %v1333, %v1331
    %v1335 = vxor.u32 %v1334, 2147483648
    %v1336 = vsel %vm1253, %v1335, %v1334
    %v1337 = vsub.s32 4, %v1313
    %v1338 = vsel %vm1253, %v1337, %v1313
    %v1339 = vsel %vm1252, %v1233, %v1336
    %v1340 = vsel %vm1252, 0, %v1338
    %v1341 = vcosq.f32.pop %v1339
    %v1342 = vsinq.f32.pop %v1339
    %vm1343 = vweird.f32 %v1233
    %v1344 = vadd.s32 %v1340, 3
    %v1345 = vand.u32 %v1344, 3
    %vm1346 = vcmp.lt.s32.totalorder %v1345, 2
    %vm1347 = vcmp.eq.s32.totalorder %v1345, 0
    %v1348 = vxor.u32 %v1342, 2147483648
    %v1349 = vsel %vm1347, %v1341, %v1348
    %vm1350 = vcmp.eq.s32.totalorder %v1345, 2
    %v1351 = vxor.u32 %v1341, 2147483648
    %v1352 = vsel %vm1350, %v1351, %v1342
    %v1353 = vsel %vm1346, %v1349, %v1352
    %v1354 = vsel %vm1343, nan, %v1353
    %v1355 = vand.u32 2147483647, %v1238
    %vm1356 = vcmp.le.f32.partialorder %v1355, 0.7853982
    %vm1357 = vcmp.lt.s32.totalorder %v1238, 0
    %v1358 = vand.u32 %v1238, 2139095040
    %v1359 = vshrl.u32 %v1358, 23
    %v1360 = vsub.s32 %v1359, 127
    %v1361 = vand.u32 2147483647, %v1238
    %v1362 = vand.u32 %v1361, 8388607
    %v1363 = vor.u32 %v1362, 8388608
    %v1364 = vsub.s32 0, %v1363
    %v1365 = vadd.s32 %v1360, 1
    %vm1366 = vcmp.gt.s32.totalorder %v1365, 0
    %v1367 = vsel %vm1366, %v1365, 0
    %v1368 = vshrl.u32 %v1367, 5
    %v1369 = vand.u32 %v1367, 31
    %v1370 = vsub.s32 32, %v1369
    %v1371 = vshrl.u32 683565275, %v1370
    %v1372 = vshll.u32 683565275, %v1369
    %v1373 = vshrl.u32 2475754826, %v1370
    %v1374 = vor.u32 %v1372, %v1373
    %v1375 = vshll.u32 2475754826, %v1369
    %v1376 = vshrl.u32 2131351028, %v1370
    %v1377 = vor.u32 %v1375, %v1376
    %v1378 = vshll.u32 2131351028, %v1369
    %v1379 = vshrl.u32 2102212464, %v1370
    %v1380 = vor.u32 %v1378, %v1379
    %v1381 = vshll.u32 2102212464, %v1369
    %v1382 = vshrl.u32 920167782, %v1370
    %v1383 = vor.u32 %v1381, %v1382
    %v1384 = vshll.u32 920167782, %v1369
    %v1385 = vshrl.u32 1326507024, %v1370
    %v1386 = vor.u32 %v1384, %v1385
    %vm1387 = vcmp.lt.s32.totalorder %v1368, 1
    %vm1388 = vcmp.lt.s32.totalorder %v1368, 2
    %vm1389 = vcmp.lt.s32.totalorder %v1368, 3
    %vm1390 = vcmp.lt.s32.totalorder %v1368, 4
    %v1391 = vsel %vm1387, %v1371, %v1374
    %v1392 = vsel %vm1390, %v1380, 2102212464
    %v1393 = vsel %vm1389, %v1377, %v1392
    %v1394 = vsel %vm1388, %v1391, %v1393
    %v1395 = vsel %vm1387, %v1374, %v1377
    %v1396 = vsel %vm1390, %v1383, 920167782
    %v1397 = vsel %vm1389, %v1380, %v1396
    %v1398 = vsel %vm1388, %v1395, %v1397
    %v1399 = vsel %vm1387, %v1377, %v1380
    %v1400 = vsel %vm1390, %v1386, 1326507024
    %v1401 = vsel %vm1389, %v1383, %v1400
    %v1402 = vsel %vm1388, %v1399, %v1401
    %v1403 = vshll.u32 %v1363, 8
    %v1404 = vmul.u32.u64.compose %v1403, %v1402
    %v1405 = vextract.low.u32 %v1404
    %v1406 = vextract.high.u32 %v1404
    %v1407 = vmul.u32.u64.compose %v1403, %v1398
    %v1408 = vextract.low.u32 %v1407
    %v1409 = vextract.high.u32 %v1407
    %v1410 = vmul.u32 %v1403, %v1394
    %v1411 = vadd.s32 %v1406, %v1408
    %vm1412 = vc.u32 %v1406, %v1408
    %v1413 = vadd.s32 %v1409, 1
    %v1414 = vsel %vm1412, %v1413, %v1409
    %v1415 = vadd.s32 %v1410, %v1414
    %v1416 = vadd.s32 %v1415, 536870912
    %v1417 = vshrl.u32 %v1416, 30
    %v1418 = vshll.u32 %v1417, 30
    %v1419 = vsub.s32 %v1415, %v1418
    %vm1420 = vcmp.lt.s32.totalorder %v1419, 0
    %v1421 = vsub.s32 0, %v1419
    %v1422 = vsel %vm1420, %v1421, %v1419
    %v1423 = vclz %v1422
    %v1424 = vsub.s32 %v1423, 2
    %vm1425 = vcmp.gt.s32.totalorder 0, %v1424
    %v1426 = vsel %vm1425, 0, %v1424
    %v1427 = vsub.s32 32, %v1426
    %v1428 = vshll.u32 %v1419, %v1426
    %v1429 = vshrl.u32 %v1411, %v1427
    %v1430 = vor.u32 %v1428, %v1429
    %v1431 = vsub.s32 4294967266, %v1426
    %v1432 = vadd.s32 %v1431, 127
    %v1433 = vshll.u32 %v1432, 23
    %v1434 = vor.u32 4788187, %v1433
    %v1435 = vand.u32 2147483647, %v1434
    %v1437 = vcvt.s32.f32 %v1430
    %v1438 = vmul.f32 %v1437, %v1435
    %v1439 = vxor.u32 %v1438, 2147483648
    %v1440 = vsel %vm1357, %v1439, %v1438
    %v1441 = vsub.s32 4, %v1417
    %v1442 = vsel %vm1357, %v1441, %v1417
    %v1443 = vsel %vm1356, %v1238, %v1440
    %v1444 = vsel %vm1356, 0, %v1442
    %v1445 = vcosq.f32.pop %v1443
    %v1446 = vsinq.f32.pop %v1443
    %vm1447 = vweird.f32 %v1238
    %v1448 = vadd.s32 %v1444, 3
    %v1449 = vand.u32 %v1448, 3
    %vm1450 = vcmp.lt.s32.totalorder %v1449, 2
    %vm1451 = vcmp.eq.s32.totalorder %v1449, 0
    %v1452 = vxor.u32 %v1446, 2147483648
    %v1453 = vsel %vm1451, %v1445, %v1452
    %vm1454 = vcmp.eq.s32.totalorder %v1449, 2
    %v1455 = vxor.u32 %v1445, 2147483648
    %v1456 = vsel %vm1454, %v1455, %v1446
    %v1457 = vsel %vm1450, %v1453, %v1456
    %v1458 = vsel %vm1447, nan, %v1457
    %v1459 = vand.u32 2147483647, %v1243
    %vm1460 = vcmp.le.f32.partialorder %v1459, 0.7853982
    %vm1461 = vcmp.lt.s32.totalorder %v1243, 0
    %v1462 = vand.u32 %v1243, 2139095040
    %v1463 = vshrl.u32 %v1462, 23
    %v1464 = vsub.s32 %v1463, 127
    %v1465 = vand.u32 2147483647, %v1243
    %v1466 = vand.u32 %v1465, 8388607
    %v1467 = vor.u32 %v1466, 8388608
    %v1468 = vsub.s32 0, %v1467
    %v1469 = vadd.s32 %v1464, 1
    %vm1470 = vcmp.gt.s32.totalorder %v1469, 0
    %v1471 = vsel %vm1470, %v1469, 0
    %v1472 = vshrl.u32 %v1471, 5
    %v1473 = vand.u32 %v1471, 31
    %v1474 = vsub.s32 32, %v1473
    %v1475 = vshrl.u32 683565275, %v1474
    %v1476 = vshll.u32 683565275, %v1473
    %v1477 = vshrl.u32 2475754826, %v1474
    %v1478 = vor.u32 %v1476, %v1477
    %v1479 = vshll.u32 2475754826, %v1473
    %v1480 = vshrl.u32 2131351028, %v1474
    %v1481 = vor.u32 %v1479, %v1480
    %v1482 = vshll.u32 2131351028, %v1473
    %v1483 = vshrl.u32 2102212464, %v1474
    %v1484 = vor.u32 %v1482, %v1483
    %v1485 = vshll.u32 2102212464, %v1473
    %v1486 = vshrl.u32 920167782, %v1474
    %v1487 = vor.u32 %v1485, %v1486
    %v1488 = vshll.u32 920167782, %v1473
    %v1489 = vshrl.u32 1326507024, %v1474
    %v1490 = vor.u32 %v1488, %v1489
    %vm1491 = vcmp.lt.s32.totalorder %v1472, 1
    %vm1492 = vcmp.lt.s32.totalorder %v1472, 2
    %vm1493 = vcmp.lt.s32.totalorder %v1472, 3
    %vm1494 = vcmp.lt.s32.totalorder %v1472, 4
    %v1495 = vsel %vm1491, %v1475, %v1478
    %v1496 = vsel %vm1494, %v1484, 2102212464
    %v1497 = vsel %vm1493, %v1481, %v1496
    %v1498 = vsel %vm1492, %v1495, %v1497
    %v1499 = vsel %vm1491, %v1478, %v1481
    %v1500 = vsel %vm1494, %v1487, 920167782
    %v1501 = vsel %vm1493, %v1484, %v1500
    %v1502 = vsel %vm1492, %v1499, %v1501
    %v1503 = vsel %vm1491, %v1481, %v1484
    %v1504 = vsel %vm1494, %v1490, 1326507024
    %v1505 = vsel %vm1493, %v1487, %v1504
    %v1506 = vsel %vm1492, %v1503, %v1505
    %v1507 = vshll.u32 %v1467, 8
    %v1508 = vmul.u32.u64.compose %v1507, %v1506
    %v1509 = vextract.low.u32 %v1508
    %v1510 = vextract.high.u32 %v1508
    %v1511 = vmul.u32.u64.compose %v1507, %v1502
    %v1512 = vextract.low.u32 %v1511
    %v1513 = vextract.high.u32 %v1511
    %v1514 = vmul.u32 %v1507, %v1498
    %v1515 = vadd.s32 %v1510, %v1512
    %vm1516 = vc.u32 %v1510, %v1512
    %v1517 = vadd.s32 %v1513, 1
    %v1518 = vsel %vm1516, %v1517, %v1513
    %v1519 = vadd.s32 %v1514, %v1518
    %v1520 = vadd.s32 %v1519, 536870912
    %v1521 = vshrl.u32 %v1520, 30
    %v1522 = vshll.u32 %v1521, 30
    %v1523 = vsub.s32 %v1519, %v1522
    %vm1524 = vcmp.lt.s32.totalorder %v1523, 0
    %v1525 = vsub.s32 0, %v1523
    %v1526 = vsel %vm1524, %v1525, %v1523
    %v1527 = vclz %v1526
    %v1528 = vsub.s32 %v1527, 2
    %vm1529 = vcmp.gt.s32.totalorder 0, %v1528
    %v1530 = vsel %vm1529, 0, %v1528
    %v1531 = vsub.s32 32, %v1530
    %v1532 = vshll.u32 %v1523, %v1530
    %v1533 = vshrl.u32 %v1515, %v1531
    %v1534 = vor.u32 %v1532, %v1533
    %v1535 = vsub.s32 4294967266, %v1530
    %v1536 = vadd.s32 %v1535, 127
    %v1537 = vshll.u32 %v1536, 23
    %v1538 = vor.u32 4788187, %v1537
    %v1539 = vand.u32 2147483647, %v1538
    %v1541 = vcvt.s32.f32 %v1534
    %v1542 = vmul.f32 %v1541, %v1539
    %v1543 = vxor.u32 %v1542, 2147483648
    %v1544 = vsel %vm1461, %v1543, %v1542
    %v1545 = vsub.s32 4, %v1521
    %v1546 = vsel %vm1461, %v1545, %v1521
    %v1547 = vsel %vm1460, %v1243, %v1544
    %v1548 = vsel %vm1460, 0, %v1546
    %v1549 = vcosq.f32.pop %v1547
    %v1550 = vsinq.f32.pop %v1547
    %vm1551 = vweird.f32 %v1243
    %v1552 = vadd.s32 %v1548, 3
    %v1553 = vand.u32 %v1552, 3
    %vm1554 = vcmp.lt.s32.totalorder %v1553, 2
    %vm1555 = vcmp.eq.s32.totalorder %v1553, 0
    %v1556 = vxor.u32 %v1550, 2147483648
    %v1557 = vsel %vm1555, %v1549, %v1556
    %vm1558 = vcmp.eq.s32.totalorder %v1553, 2
    %v1559 = vxor.u32 %v1549, 2147483648
    %v1560 = vsel %vm1558, %v1559, %v1550
    %v1561 = vsel %vm1554, %v1557, %v1560
    %v1562 = vsel %vm1551, nan, %v1561
    %v1563 = vand.u32 2147483647, %v1248
    %vm1564 = vcmp.le.f32.partialorder %v1563, 0.7853982
    %vm1565 = vcmp.lt.s32.totalorder %v1248, 0
    %v1566 = vand.u32 %v1248, 2139095040
    %v1567 = vshrl.u32 %v1566, 23
    %v1568 = vsub.s32 %v1567, 127
    %v1569 = vand.u32 2147483647, %v1248
    %v1570 = vand.u32 %v1569, 8388607
    %v1571 = vor.u32 %v1570, 8388608
    %v1572 = vsub.s32 0, %v1571
    %v1573 = vadd.s32 %v1568, 1
    %vm1574 = vcmp.gt.s32.totalorder %v1573, 0
    %v1575 = vsel %vm1574, %v1573, 0
    %v1576 = vshrl.u32 %v1575, 5
    %v1577 = vand.u32 %v1575, 31
    %v1578 = vsub.s32 32, %v1577
    %v1579 = vshrl.u32 683565275, %v1578
    %v1580 = vshll.u32 683565275, %v1577
    %v1581 = vshrl.u32 2475754826, %v1578
    %v1582 = vor.u32 %v1580, %v1581
    %v1583 = vshll.u32 2475754826, %v1577
    %v1584 = vshrl.u32 2131351028, %v1578
    %v1585 = vor.u32 %v1583, %v1584
    %v1586 = vshll.u32 2131351028, %v1577
    %v1587 = vshrl.u32 2102212464, %v1578
    %v1588 = vor.u32 %v1586, %v1587
    %v1589 = vshll.u32 2102212464, %v1577
    %v1590 = vshrl.u32 920167782, %v1578
    %v1591 = vor.u32 %v1589, %v1590
    %v1592 = vshll.u32 920167782, %v1577
    %v1593 = vshrl.u32 1326507024, %v1578
    %v1594 = vor.u32 %v1592, %v1593
    %vm1595 = vcmp.lt.s32.totalorder %v1576, 1
    %vm1596 = vcmp.lt.s32.totalorder %v1576, 2
    %vm1597 = vcmp.lt.s32.totalorder %v1576, 3
    %vm1598 = vcmp.lt.s32.totalorder %v1576, 4
    %v1599 = vsel %vm1595, %v1579, %v1582
    %v1600 = vsel %vm1598, %v1588, 2102212464
    %v1601 = vsel %vm1597, %v1585, %v1600
    %v1602 = vsel %vm1596, %v1599, %v1601
    %v1603 = vsel %vm1595, %v1582, %v1585
    %v1604 = vsel %vm1598, %v1591, 920167782
    %v1605 = vsel %vm1597, %v1588, %v1604
    %v1606 = vsel %vm1596, %v1603, %v1605
    %v1607 = vsel %vm1595, %v1585, %v1588
    %v1608 = vsel %vm1598, %v1594, 1326507024
    %v1609 = vsel %vm1597, %v1591, %v1608
    %v1610 = vsel %vm1596, %v1607, %v1609
    %v1611 = vshll.u32 %v1571, 8
    %v1612 = vmul.u32.u64.compose %v1611, %v1610
    %v1613 = vextract.low.u32 %v1612
    %v1614 = vextract.high.u32 %v1612
    %v1615 = vmul.u32.u64.compose %v1611, %v1606
    %v1616 = vextract.low.u32 %v1615
    %v1617 = vextract.high.u32 %v1615
    %v1618 = vmul.u32 %v1611, %v1602
    %v1619 = vadd.s32 %v1614, %v1616
    %vm1620 = vc.u32 %v1614, %v1616
    %v1621 = vadd.s32 %v1617, 1
    %v1622 = vsel %vm1620, %v1621, %v1617
    %v1623 = vadd.s32 %v1618, %v1622
    %v1624 = vadd.s32 %v1623, 536870912
    %v1625 = vshrl.u32 %v1624, 30
    %v1626 = vshll.u32 %v1625, 30
    %v1627 = vsub.s32 %v1623, %v1626
    %vm1628 = vcmp.lt.s32.totalorder %v1627, 0
    %v1629 = vsub.s32 0, %v1627
    %v1630 = vsel %vm1628, %v1629, %v1627
    %v1631 = vclz %v1630
    %v1632 = vsub.s32 %v1631, 2
    %vm1633 = vcmp.gt.s32.totalorder 0, %v1632
    %v1634 = vsel %vm1633, 0, %v1632
    %v1635 = vsub.s32 32, %v1634
    %v1636 = vshll.u32 %v1627, %v1634
    %v1637 = vshrl.u32 %v1619, %v1635
    %v1638 = vor.u32 %v1636, %v1637
    %v1639 = vsub.s32 4294967266, %v1634
    %v1640 = vadd.s32 %v1639, 127
    %v1641 = vshll.u32 %v1640, 23
    %v1642 = vor.u32 4788187, %v1641
    %v1643 = vand.u32 2147483647, %v1642
    %v1645 = vcvt.s32.f32 %v1638
    %v1646 = vmul.f32 %v1645, %v1643
    %v1647 = vxor.u32 %v1646, 2147483648
    %v1648 = vsel %vm1565, %v1647, %v1646
    %v1649 = vsub.s32 4, %v1625
    %v1650 = vsel %vm1565, %v1649, %v1625
    %v1651 = vsel %vm1564, %v1248, %v1648
    %v1652 = vsel %vm1564, 0, %v1650
    %v1653 = vcosq.f32.pop %v1651
    %v1654 = vsinq.f32.pop %v1651
    %vm1655 = vweird.f32 %v1248
    %v1656 = vadd.s32 %v1652, 3
    %v1657 = vand.u32 %v1656, 3
    %vm1658 = vcmp.lt.s32.totalorder %v1657, 2
    %vm1659 = vcmp.eq.s32.totalorder %v1657, 0
    %v1660 = vxor.u32 %v1654, 2147483648
    %v1661 = vsel %vm1659, %v1653, %v1660
    %vm1662 = vcmp.eq.s32.totalorder %v1657, 2
    %v1663 = vxor.u32 %v1653, 2147483648
    %v1664 = vsel %vm1662, %v1663, %v1654
    %v1665 = vsel %vm1658, %v1661, %v1664
    %v1666 = vsel %vm1655, nan, %v1665
    %v1667 = vld [vmem:[#allocation4 + $0x30] sm:$0xff]
    %v1668 = vld [vmem:[#allocation4 + $0x68] sm:$0xff]
    %v1669 = vld [vmem:[#allocation4 + $0xa0] sm:$0xff]
    %v1670 = vld [vmem:[#allocation4 + $0xd8] sm:$0xff]
    %v1672 = vsel %vm612, %v1667, 0
    %v1675 = vsel %vm612, %v1668, 0
    %v1678 = vsel %vm612, %v1669, 0
    %v1681 = vsel %vm612, %v1670, 0
    %1683 = vmatprep.subr.mxu0 0.0
    %1684 = vmatpush1.msra.mxu0 %v1354
    %1685 = vmatprep.subr.mxu0 0.0
    %1686 = vmatpush1.msra.mxu0 %v1458
    %1687 = vmatprep.subr.mxu0 0.0
    %1688 = vmatpush1.msra.mxu0 %v1562
    %1689 = vmatprep.subr.mxu0 0.0
    %1690 = vmatpush1.msra.mxu0 %v1666
    %1691 = vmatprep.subr.mxu0 0.0
    %1692 = vmatpush1.msra.mxu0 0.0
    %1693 = vmatprep.subr.mxu0 0.0
    %1694 = vmatpush1.msra.mxu0 0.0
    %1695 = vmatprep.subr.mxu0 0.0
    %1696 = vmatpush1.msra.mxu0 0.0
    %1697 = vmatprep.subr.mxu0 0.0
    %1698 = vmatpush1.msra.mxu0 0.0
    %1699 = vmatprep.subr.mxu0 0.0
    %1700 = vmatpush1.msra.mxu0 0.0
    %1701 = vmatprep.subr.mxu0 0.0
    %1702 = vmatpush1.msra.mxu0 0.0
    %1703 = vmatprep.subr.mxu0 0.0
    %1704 = vmatpush1.msra.mxu0 0.0
    %1705 = vmatprep.subr.mxu0 0.0
    %1706 = vmatpush1.msra.mxu0 0.0
    %1707 = vmatprep.subr.mxu0 0.0
    %1708 = vmatpush1.msra.mxu0 0.0
    %1709 = vmatprep.subr.mxu0 0.0
    %1710 = vmatpush1.msra.mxu0 0.0
    %1711 = vmatprep.subr.mxu0 0.0
    %1712 = vmatpush1.msra.mxu0 0.0
    %1713 = vmatprep.subr.mxu0 0.0
    %1714 = vmatpush1.msra.mxu0 0.0
    %1715 = vmatprep.subr.mxu0 0.0
    %1716 = vmatpush1.msra.mxu0 0.0
    %1717 = vmatprep.subr.mxu0 0.0
    %1718 = vmatpush1.msra.mxu0 0.0
    %1719 = vmatprep.subr.mxu0 0.0
    %1720 = vmatpush1.msra.mxu0 0.0
    %1721 = vmatprep.subr.mxu0 0.0
    %1722 = vmatpush1.msra.mxu0 0.0
    %1723 = vmatprep.subr.mxu0 0.0
    %1724 = vmatpush1.msra.mxu0 0.0
    %1725 = vmatprep.subr.mxu0 0.0
    %1726 = vmatpush1.msra.mxu0 0.0
    %1727 = vmatprep.subr.mxu0 0.0
    %1728 = vmatpush1.msra.mxu0 0.0
    %1729 = vmatprep.subr.mxu0 0.0
    %1730 = vmatpush1.msra.mxu0 0.0
    %1731 = vmatprep.subr.mxu0 0.0
    %1732 = vmatpush1.msra.mxu0 0.0
    %1733 = vmatprep.subr.mxu0 0.0
    %1734 = vmatpush1.msra.mxu0 0.0
    %1735 = vmatprep.subr.mxu0 0.0
    %1736 = vmatpush1.msra.mxu0 0.0
    %1737 = vmatprep.subr.mxu0 0.0
    %1738 = vmatpush1.msra.mxu0 0.0
    %1739 = vmatprep.subr.mxu0 0.0
    %1740 = vmatpush1.msra.mxu0 0.0
    %1741 = vmatprep.subr.mxu0 0.0
    %1742 = vmatpush1.msra.mxu0 0.0
    %1743 = vmatprep.subr.mxu0 0.0
    %1744 = vmatpush1.msra.mxu0 0.0
    %1745 = vmatprep.subr.mxu0 0.0
    %1746 = vmatpush1.msra.mxu0 0.0
    %1747 = vmatprep.mubr.f32.mxu0 0.0
    %1748 = vmatmul.mubr.f32.gmra.mrb[0].mxu0 %v1672
    %v1749 = vpop.f32.mrb[0].mxu0
    %v1750 = vadd.f32 0.0, %v1749
    %v1751 = vpop.f32.mrb[0].mxu0
    %1752 = vmatprep.mubr.f32.mxu0 0.0
    %1753 = vmatmul.mubr.f32.gmra.mrb[0].mxu0 %v1675
    %v1754 = vpop.f32.mrb[0].mxu0
    %v1755 = vadd.f32 0.0, %v1754
    %v1756 = vpop.f32.mrb[0].mxu0
    %1757 = vmatprep.mubr.f32.mxu0 0.0
    %1758 = vmatmul.mubr.f32.gmra.mrb[0].mxu0 %v1678
    %v1759 = vpop.f32.mrb[0].mxu0
    %v1760 = vadd.f32 0.0, %v1759
    %v1761 = vpop.f32.mrb[0].mxu0
    %1762 = vmatprep.mubr.f32.mxu0 0.0
    %1763 = vmatmul.mubr.f32.gmra.mrb[0].mxu0 %v1681
    %v1764 = vpop.f32.mrb[0].mxu0
    %v1765 = vadd.f32 0.0, %v1764
    %v1766 = vpop.f32.mrb[0].mxu0
    %1767 = vdwg.mxu0
    %vm1768 = vcmask 64512
    %1769 = vst.msk [vmem:[%s2] sm:$0xff] %vm1768, %v1750
    %1770 = vst.msk [vmem:[%s2 + $0x8] sm:$0xff] %vm1768, %v1755
    %1771 = vst.msk [vmem:[%s2 + $0x10] sm:$0xff] %vm1768, %v1760
    %1772 = vst.msk [vmem:[%s2 + $0x18] sm:$0xff] %vm1768, %v1765
    // Predicated region
    $region18: #{tpu_custom_call.1} parent=1 // pred_check
      _
    $region19: #{tpu_custom_call.1} parent=1 // pred_check_branch
      %1774 = sbr.rel (0) target = $region21
    $region20: #{tpu_custom_call.1} parent=1 // pred_region
      _
    $region21: #{tpu_custom_call.1} parent=1 // pred_fallthru
      _
    // Predicated region
    $region22: #{tpu_custom_call.1} parent=1 // pred_check
      _
    $region23: #{tpu_custom_call.1} parent=1 // pred_check_branch
      %1776 = sbr.rel (0) target = $region25
    $region24: #{tpu_custom_call.1} parent=1 // pred_region
      _
    $region25: #{tpu_custom_call.1} parent=1 // pred_fallthru
      _
    %1777 = vsyncpa [#allocation3], 1
    %1778 = vsyncpa [#allocation5], 1

</llo_original>
